<compile_context>
chip_gen: v7x
topology: tpu7x:2x2x1
jax: 0.10.0
libtpu: 0.0.40
codegen_flags: <defaults>
</compile_context>

<pallas_src>
import functools

import jax
import jax.numpy as jnp
import numpy as np
from jax import lax
from jax.experimental import pallas as pl
from jax.experimental.pallas import tpu as pltpu

LANE = 128
SUBLANE = 8
_VMEM_BUDGET = 40 * 1024 * 1024   # tile budget: safe on v7x (64 MiB physical VMEM)
_VMEM_LIMIT = 48 * 1024 * 1024    # scoped VMEM limit handed to Mosaic


def _round_up(n, m):
    return ((n + m - 1) // m) * m


def _pick_tile_rows(m_rows, in_row_bytes, out_row_bytes, resident_bytes,
                    cap=1024, align=16):
    """Largest row tile that is layout friendly (multiple of `align`, or the whole
    array when it is small) and keeps double-buffered tiles + resident operands
    inside the VMEM budget."""
    if m_rows <= align:
        return m_rows                              # single block == full array

    tm = min(cap, (m_rows // align) * align)

    def need(t):
        return 2 * t * in_row_bytes + 2 * t * out_row_bytes + resident_bytes

    while tm > align and need(tm) > _VMEM_BUDGET:
        tm = max(align, ((tm // 2) // align) * align)
    return tm


# ----------------------------------------------------------------------------
# Pallas kernels
# ----------------------------------------------------------------------------
def _conv_matmul_kernel(a_ref, w_ref, b_ref, o_ref, *stats_refs,
                        neg_slope, tm, m_total):
    """(tm, K) bf16 @ (K, Coutp) bf16 -> f32 accumulate, + bias, optional LeakyReLU,
    optional per-block channel sum / sum-of-squares (BatchNorm statistics)."""
    acc = jnp.dot(a_ref[...], w_ref[...], preferred_element_type=jnp.float32)
    acc = acc + b_ref[...]                             # (1, Coutp) broadcast
    if neg_slope is not None:
        acc = jnp.where(acc >= 0, acc, neg_slope * acc)
    o_ref[...] = acc.astype(o_ref.dtype)

    if stats_refs:
        (stats_ref,) = stats_refs
        i = pl.program_id(0)
        coutp = acc.shape[1]
        # Mask rows past the true M (tail-block reads are garbage).
        rows = lax.broadcasted_iota(jnp.int32, acc.shape, 0) + i * tm
        masked = jnp.where(rows < m_total, acc, 0.0)
        ssum = jnp.sum(masked, axis=0, keepdims=True)            # (1, Coutp)
        ssq = jnp.sum(masked * masked, axis=0, keepdims=True)    # (1, Coutp)
        r = lax.broadcasted_iota(jnp.int32, (SUBLANE, coutp), 0)
        blk = jnp.where(r == 0, ssum, 0.0) + jnp.where(r == 1, ssq, 0.0)
        stats_ref[...] = blk[None]                               # (1, 8, Coutp)


def _affine_lrelu_kernel(x_ref, scale_ref, shift_ref, o_ref, *, neg_slope):
    """BatchNorm affine (precomputed per-channel scale/shift) fused with LeakyReLU."""
    y = x_ref[...] * scale_ref[...] + shift_ref[...]
    y = jnp.where(y >= 0, y, neg_slope * y)
    o_ref[...] = y.astype(o_ref.dtype)


# ----------------------------------------------------------------------------
# Conv2d = im2col (glue) + Pallas matmul
# ----------------------------------------------------------------------------
def _im2col(x_nhwc, k, stride, pad):
    N, H, W, C = x_nhwc.shape
    xp = jnp.pad(x_nhwc, ((0, 0), (pad, pad), (pad, pad), (0, 0)))
    Hp, Wp = H + 2 * pad, W + 2 * pad
    Ho = (Hp - k) // stride + 1
    Wo = (Wp - k) // stride + 1
    cols = []
    for di in range(k):
        for dj in range(k):
            patch = lax.slice(
                xp,
                (0, di, dj, 0),
                (N, di + (Ho - 1) * stride + 1, dj + (Wo - 1) * stride + 1, C),
                (1, stride, stride, 1),
            )
            cols.append(patch)                   # (N, Ho, Wo, C)
    patches = jnp.stack(cols, axis=3)            # (N, Ho, Wo, k*k, C)
    return patches.reshape(N * Ho * Wo, k * k * C), N, Ho, Wo


def conv2d_pallas(x_nhwc, w_oihw, bias, stride, pad, neg_slope=None,
                  with_stats=False, out_dtype=jnp.float32):
    Cout, Cin, k, _ = w_oihw.shape
    patches, N, Ho, Wo = _im2col(x_nhwc, k, stride, pad)
    M, K = patches.shape
    Coutp = _round_up(Cout, LANE)                # lane-dense output channels

    # bf16 operands -> native MXU passes + half the A/W DMA bytes; f32 accumulation.
    a_bf16 = patches.astype(jnp.bfloat16)
    wm = jnp.transpose(w_oihw, (2, 3, 1, 0)).reshape(K, Cout)      # matches im2col order
    wm = jnp.pad(wm, ((0, 0), (0, Coutp - Cout))).astype(jnp.bfloat16)
    b = bias if bias is not None else jnp.zeros((Cout,), jnp.float32)
    b2 = jnp.pad(b, (0, Coutp - Cout)).reshape(1, Coutp).astype(jnp.float32)

    Mp = max(M, SUBLANE)
    if Mp != M:                                  # only for degenerate tiny M
        a_bf16 = jnp.pad(a_bf16, ((0, Mp - M), (0, 0)))

    out_itemsize = jnp.dtype(out_dtype).itemsize
    resident = 2 * K * Coutp * 2 + 2 * Coutp * 4 + 2 * SUBLANE * Coutp * 4
    tm = _pick_tile_rows(Mp, K * 2, Coutp * out_itemsize, resident)
    n_blocks = pl.cdiv(Mp, tm)

    out_shapes = [jax.ShapeDtypeStruct((Mp, Coutp), out_dtype)]
    out_specs = [pl.BlockSpec((tm, Coutp), lambda i: (i, 0))]
    if with_stats:
        out_shapes.append(jax.ShapeDtypeStruct((n_blocks, SUBLANE, Coutp), jnp.float32))
        out_specs.append(pl.BlockSpec((1, SUBLANE, Coutp), lambda i: (i, 0, 0)))

    cost = pl.CostEstimate(
        flops=2 * M * K * Coutp,
        transcendentals=0,
        bytes_accessed=a_bf16.size * 2 + wm.size * 2 + Mp * Coutp * out_itemsize,
    )

    res = pl.pallas_call(
        functools.partial(_conv_matmul_kernel, neg_slope=neg_slope, tm=tm, m_total=M),
        out_shape=tuple(out_shapes) if with_stats else out_shapes[0],
        grid_spec=pltpu.PrefetchScalarGridSpec(
            num_scalar_prefetch=0,
            grid=(n_blocks,),
            in_specs=[
                pl.BlockSpec((tm, K), lambda i: (i, 0)),
                pl.BlockSpec((K, Coutp), lambda i: (0, 0)),
                pl.BlockSpec((1, Coutp), lambda i: (0, 0)),
            ],
            out_specs=tuple(out_specs) if with_stats else out_specs[0],
        ),
        compiler_params=pltpu.CompilerParams(
            dimension_semantics=("parallel",),
            vmem_limit_bytes=_VMEM_LIMIT,
        ),
        cost_estimate=cost,
    )(a_bf16, wm, b2)

    if with_stats:
        out, stats = res
    else:
        out, stats = res, None
    if Mp != M:
        out = out[:M]
    return out, stats, (N, Ho, Wo, Cout, Coutp)


# ----------------------------------------------------------------------------
# BatchNorm2d (training-mode batch stats, fused stats from conv) + LeakyReLU
# ----------------------------------------------------------------------------
def batchnorm_lrelu_pallas(x_mat, stats, gamma, beta, M, C, Coutp, neg_slope,
                           eps=1e-5, out_dtype=jnp.bfloat16):
    # Finalize statistics from the per-block sums emitted by the conv epilogue
    # (no extra HBM pass over the activation just to get mean/var).
    ssum = jnp.sum(stats[:, 0, :], axis=0)                 # (Coutp,)
    ssq = jnp.sum(stats[:, 1, :], axis=0)
    mean = ssum / M
    var = jnp.maximum(ssq / M - mean * mean, 0.0)          # biased var == torch BN fwd
    gamma_p = jnp.pad(gamma, (0, Coutp - C))               # padded channels -> scale 0
    beta_p = jnp.pad(beta, (0, Coutp - C))
    scale = gamma_p / jnp.sqrt(var + eps)
    shift = beta_p - mean * scale

    Mp = max(M, SUBLANE)
    if Mp != M:
        x_mat = jnp.pad(x_mat, ((0, Mp - M), (0, 0)))

    out_itemsize = jnp.dtype(out_dtype).itemsize
    tm = _pick_tile_rows(Mp, Coutp * 4, Coutp * out_itemsize, 4 * Coutp * 4)

    out = pl.pallas_call(
        functools.partial(_affine_lrelu_kernel, neg_slope=neg_slope),
        out_shape=jax.ShapeDtypeStruct((Mp, Coutp), out_dtype),
        grid_spec=pltpu.PrefetchScalarGridSpec(
            num_scalar_prefetch=0,
            grid=(pl.cdiv(Mp, tm),),
            in_specs=[
                pl.BlockSpec((tm, Coutp), lambda i: (i, 0)),
                pl.BlockSpec((1, Coutp), lambda i: (0, 0)),
                pl.BlockSpec((1, Coutp), lambda i: (0, 0)),
            ],
            out_specs=pl.BlockSpec((tm, Coutp), lambda i: (i, 0)),
        ),
        compiler_params=pltpu.CompilerParams(
            dimension_semantics=("parallel",),
            vmem_limit_bytes=_VMEM_LIMIT,
        ),
    )(x_mat, scale.reshape(1, Coutp).astype(jnp.float32),
      shift.reshape(1, Coutp).astype(jnp.float32))

    return out[:M] if Mp != M else out


# ----------------------------------------------------------------------------
# Discriminator: parameter construction + forward
# ----------------------------------------------------------------------------
def make_params(key, image_channels, num_filters_last, n_layers):
    k = 4

    def conv_init(key, cout, cin, use_bias):
        kw, kb = jax.random.split(key)
        w = 0.02 * jax.random.normal(kw, (cout, cin, k, k), jnp.float32)
        b = 0.02 * jax.random.normal(kb, (cout,), jnp.float32) if use_bias else None
        return w, b

    keys = jax.random.split(key, n_layers + 2)
    layers = []

    # norm_layer is nn.BatchNorm2d -> use_bias = False for the middle convs.
    w, b = conv_init(keys[0], num_filters_last, image_channels, True)
    layers.append(dict(w=w, b=b, stride=2, bn=None, act=0.2))

    mult = 1
    for i in range(1, n_layers + 1):
        mult_last = mult
        mult = min(2 ** i, 8)
        cin = num_filters_last * mult_last
        cout = num_filters_last * mult
        w, _ = conv_init(keys[i], cout, cin, False)
        gamma = 1.0 + 0.1 * jnp.arange(cout, dtype=jnp.float32) / cout
        beta = 0.01 * jnp.arange(cout, dtype=jnp.float32)
        layers.append(dict(w=w, b=None, stride=2 if i < n_layers else 1,
                           bn=(gamma, beta), act=0.2))

    w, b = conv_init(keys[n_layers + 1], 1, num_filters_last * mult, True)
    layers.append(dict(w=w, b=b, stride=1, bn=None, act=None))
    return layers


def discriminator_forward(params, x_nchw):
    x = jnp.transpose(x_nchw, (0, 2, 3, 1))      # NCHW -> NHWC
    n_total = len(params)
    for li, layer in enumerate(params):
        with_stats = layer["bn"] is not None
        is_last = li == n_total - 1
        # For BN layers: conv (no bias, no activation) -> BN -> LeakyReLU.
        act = None if with_stats else layer["act"]
        # Activations that only feed the next conv are stored bf16 (the next im2col
        # casts to bf16 anyway); BN conv outputs stay f32 into the affine pass.
        conv_out_dtype = jnp.float32 if (with_stats or is_last) else jnp.bfloat16
        out_mat, stats, (N, Ho, Wo, Cout, Coutp) = conv2d_pallas(
            x, layer["w"], layer["b"], layer["stride"], 1,
            neg_slope=act, with_stats=with_stats, out_dtype=conv_out_dtype)
        if with_stats:
            gamma, beta = layer["bn"]
            out_mat = batchnorm_lrelu_pallas(
                out_mat, stats, gamma, beta, N * Ho * Wo, Cout, Coutp,
                layer["act"], out_dtype=jnp.bfloat16)
        # Drop the lane-padding channels; XLA fuses this slice into the next im2col.
        x = out_mat[:, :Cout].reshape(N, Ho, Wo, Cout)
    return jnp.transpose(x, (0, 3, 1, 2)).astype(jnp.float32)   # NHWC -> NCHW


# Pure-JAX reference for verification (same bf16-operand / f32-accumulate contract).
def reference_forward(params, x_nchw):
    x = jnp.transpose(x_nchw, (0, 2, 3, 1)).astype(jnp.float32)
    for layer in params:
        w = jnp.transpose(layer["w"], (2, 3, 1, 0))        # OIHW -> HWIO
        x = lax.conv_general_dilated(
            x.astype(jnp.bfloat16), w.astype(jnp.bfloat16),
            (layer["stride"],) * 2, [(1, 1), (1, 1)],
            dimension_numbers=("NHWC", "HWIO", "NHWC"),
            preferred_element_type=jnp.float32)
        if layer["b"] is not None:
            x = x + layer["b"]
        if layer["bn"] is not None:
            mean = jnp.mean(x, axis=(0, 1, 2))
            var = jnp.mean((x - mean) ** 2, axis=(0, 1, 2))
            gamma, beta = layer["bn"]
            x = (x - mean) / jnp.sqrt(var + 1e-5) * gamma + beta
        if layer["act"] is not None:
            x = jnp.where(x >= 0, x, layer["act"] * x)
    return jnp.transpose(x, (0, 3, 1, 2))


if __name__ == "__main__":
    configs = dict(image_channels=3, num_filters_last=8, n_layers=2)
    key = jax.random.PRNGKey(0)
    kx, kp = jax.random.split(key)

    x = jax.random.normal(kx, (2, configs["image_channels"], 16, 16), jnp.float32)
    params = make_params(kp, **configs)

    fwd = jax.jit(lambda xx: discriminator_forward(params, xx))
    y = jax.block_until_ready(fwd(x))

    assert y.shape == (2, 1, 2, 2), y.shape
    y_ref = reference_forward(params, x)
    if not np.allclose(np.asarray(y), np.asarray(y_ref), atol=2e-2, rtol=2e-2):
        raise AssertionError("Pallas output mismatch vs JAX reference")

    print("KERNEL_OK")
</pallas_src>

<mosaic_0001>
module attributes {stable_mosaic.version = 11 : i64} {
  func.func @_conv_matmul_kernel(%arg0: i32, %arg1: memref<128x48xbf16, #tpu.memory_space<vmem>>, %arg2: memref<48x128xbf16, #tpu.memory_space<vmem>>, %arg3: memref<1x128xf32, #tpu.memory_space<vmem>>, %arg4: memref<128x128xbf16, #tpu.memory_space<vmem>>) attributes {dimension_semantics = [#tpu.dimension_semantics<parallel>], iteration_bounds = array<i64: 1>, scalar_prefetch = 0 : i64, scratch_operands = 0 : i64, tpu.core_type = #tpu.core_type<tc>, window_params = [{transform_indices = @transform_0, window_bounds = array<i64: 128, 48>}, {pipeline_mode = #tpu.pipeline_mode<synchronous>, transform_indices = @transform_1, window_bounds = array<i64: 48, 128>}, {pipeline_mode = #tpu.pipeline_mode<synchronous>, transform_indices = @transform_2, window_bounds = array<i64: 1, 128>}, {transform_indices = @transform_3, window_bounds = array<i64: 128, 128>}]} {
    %c0 = arith.constant 0 : index
    %c0_0 = arith.constant 0 : index
    %0 = vector.load %arg1[%c0, %c0_0] : memref<128x48xbf16, #tpu.memory_space<vmem>>, vector<128x48xbf16>
    %c0_1 = arith.constant 0 : index
    %c0_2 = arith.constant 0 : index
    %1 = vector.load %arg2[%c0_1, %c0_2] : memref<48x128xbf16, #tpu.memory_space<vmem>>, vector<48x128xbf16>
    %cst = arith.constant dense<0.000000e+00> : vector<128x128xf32>
    %2 = tpu.matmul %0, %1, %cst {dimension_numbers = #tpu.dot_dimension_numbers<[1], [0], [0], [1], [0, 0, 1, 1], [], []>} : vector<128x48xbf16>, vector<48x128xbf16>, vector<128x128xf32> -> vector<128x128xf32>
    %c0_3 = arith.constant 0 : index
    %c0_4 = arith.constant 0 : index
    %3 = vector.load %arg3[%c0_3, %c0_4] : memref<1x128xf32, #tpu.memory_space<vmem>>, vector<1x128xf32>
    %4 = vector.broadcast %3 : vector<1x128xf32> to vector<128x128xf32>
    %5 = arith.addf %2, %4 : vector<128x128xf32>
    %cst_5 = arith.constant 0.000000e+00 : f32
    %6 = vector.broadcast %cst_5 : f32 to vector<128x128xf32>
    %7 = arith.cmpf oge, %5, %6 : vector<128x128xf32>
    %cst_6 = arith.constant 2.000000e-01 : f32
    %8 = vector.broadcast %cst_6 : f32 to vector<128x128xf32>
    %9 = arith.mulf %8, %5 : vector<128x128xf32>
    %10 = arith.select %7, %5, %9 : vector<128x128xi1>, vector<128x128xf32>
    %11 = arith.truncf %10 : vector<128x128xf32> to vector<128x128xbf16>
    %c0_7 = arith.constant 0 : index
    %c0_8 = arith.constant 0 : index
    %12 = vector.load %arg4[%c0_7, %c0_8] : memref<128x128xbf16, #tpu.memory_space<vmem>>, vector<128x128xbf16>
    tpu.vector_store %arg4[%c0_7, %c0_8], %11 {strides = array<i32>} : memref<128x128xbf16, #tpu.memory_space<vmem>>, vector<128x128xbf16>,
    return
  }
  func.func @transform_0(%arg0: i32) -> (i32, i32) {
    %c0_i32 = arith.constant 0 : i32
    %c0_i32_0 = arith.constant 0 : i32
    return %arg0, %c0_i32 : i32, i32
  }
  func.func @transform_1(%arg0: i32) -> (i32, i32) {
    %c0_i32 = arith.constant 0 : i32
    %c0_i32_0 = arith.constant 0 : i32
    %c0_i32_1 = arith.constant 0 : i32
    return %c0_i32, %c0_i32_0 : i32, i32
  }
  func.func @transform_2(%arg0: i32) -> (i32, i32) {
    %c0_i32 = arith.constant 0 : i32
    %c0_i32_0 = arith.constant 0 : i32
    %c0_i32_1 = arith.constant 0 : i32
    return %c0_i32, %c0_i32_0 : i32, i32
  }
  func.func @transform_3(%arg0: i32) -> (i32, i32) {
    %c0_i32 = arith.constant 0 : i32
    %c0_i32_0 = arith.constant 0 : i32
    return %arg0, %c0_i32 : i32, i32
  }
}

module attributes {stable_mosaic.version = 11 : i64} {
  func.func @_conv_matmul_kernel(%arg0: i32, %arg1: memref<32x128xbf16, #tpu.memory_space<vmem>>, %arg2: memref<128x128xbf16, #tpu.memory_space<vmem>>, %arg3: memref<1x128xf32, #tpu.memory_space<vmem>>, %arg4: memref<32x128xf32, #tpu.memory_space<vmem>>, %arg5: memref<1x8x128xf32, #tpu.memory_space<vmem>>) attributes {dimension_semantics = [#tpu.dimension_semantics<parallel>], iteration_bounds = array<i64: 1>, scalar_prefetch = 0 : i64, scratch_operands = 0 : i64, tpu.core_type = #tpu.core_type<tc>, window_params = [{transform_indices = @transform_0, window_bounds = array<i64: 32, 128>}, {pipeline_mode = #tpu.pipeline_mode<synchronous>, transform_indices = @transform_1, window_bounds = array<i64: 128, 128>}, {pipeline_mode = #tpu.pipeline_mode<synchronous>, transform_indices = @transform_2, window_bounds = array<i64: 1, 128>}, {transform_indices = @transform_3, window_bounds = array<i64: 32, 128>}, {transform_indices = @transform_4, window_bounds = array<i64: 1, 8, 128>}]} {
    %c0 = arith.constant 0 : index
    %c0_0 = arith.constant 0 : index
    %0 = vector.load %arg1[%c0, %c0_0] : memref<32x128xbf16, #tpu.memory_space<vmem>>, vector<32x128xbf16>
    %c0_1 = arith.constant 0 : index
    %c0_2 = arith.constant 0 : index
    %1 = vector.load %arg2[%c0_1, %c0_2] : memref<128x128xbf16, #tpu.memory_space<vmem>>, vector<128x128xbf16>
    %cst = arith.constant dense<0.000000e+00> : vector<32x128xf32>
    %2 = tpu.matmul %0, %1, %cst {dimension_numbers = #tpu.dot_dimension_numbers<[1], [0], [0], [1], [0, 0, 1, 1], [], []>} : vector<32x128xbf16>, vector<128x128xbf16>, vector<32x128xf32> -> vector<32x128xf32>
    %c0_3 = arith.constant 0 : index
    %c0_4 = arith.constant 0 : index
    %3 = vector.load %arg3[%c0_3, %c0_4] : memref<1x128xf32, #tpu.memory_space<vmem>>, vector<1x128xf32>
    %4 = vector.broadcast %3 : vector<1x128xf32> to vector<32x128xf32>
    %5 = arith.addf %2, %4 : vector<32x128xf32>
    %c0_5 = arith.constant 0 : index
    %c0_6 = arith.constant 0 : index
    %6 = vector.load %arg4[%c0_5, %c0_6] : memref<32x128xf32, #tpu.memory_space<vmem>>, vector<32x128xf32>
    tpu.vector_store %arg4[%c0_5, %c0_6], %5 {strides = array<i32>} : memref<32x128xf32, #tpu.memory_space<vmem>>, vector<32x128xf32>,
    %7 = tpu.iota {dimensions = array<i32: 0>} : vector<32x128xi32>
    %c32_i32 = arith.constant 32 : i32
    %8 = arith.muli %arg0, %c32_i32 : i32
    %9 = vector.broadcast %8 : i32 to vector<32x128xi32>
    %10 = arith.addi %7, %9 : vector<32x128xi32>
    %c32_i32_7 = arith.constant 32 : i32
    %11 = vector.broadcast %c32_i32_7 : i32 to vector<32x128xi32>
    %12 = arith.cmpi slt, %10, %11 : vector<32x128xi32>
    %cst_8 = arith.constant 0.000000e+00 : f32
    %13 = vector.broadcast %cst_8 : f32 to vector<32x128xf32>
    %14 = arith.select %12, %5, %13 : vector<32x128xi1>, vector<32x128xf32>
    %cst_9 = arith.constant dense<0.000000e+00> : vector<128xf32>
    %15 = vector.multi_reduction <add>, %14, %cst_9 [0] : vector<32x128xf32> to vector<128xf32>
    %16 = vector.shape_cast %15 : vector<128xf32> to vector<1x128xf32>
    %17 = arith.mulf %14, %14 : vector<32x128xf32>
    %cst_10 = arith.constant dense<0.000000e+00> : vector<128xf32>
    %18 = vector.multi_reduction <add>, %17, %cst_10 [0] : vector<32x128xf32> to vector<128xf32>
    %19 = vector.shape_cast %18 : vector<128xf32> to vector<1x128xf32>
    %20 = tpu.iota {dimensions = array<i32: 0>} : vector<8x128xi32>
    %c0_i32 = arith.constant 0 : i32
    %21 = vector.broadcast %c0_i32 : i32 to vector<8x128xi32>
    %22 = arith.cmpi eq, %20, %21 : vector<8x128xi32>
    %cst_11 = arith.constant 0.000000e+00 : f32
    %23 = vector.shape_cast %16 : vector<1x128xf32> to vector<1x128xf32>
    %24 = vector.broadcast %23 : vector<1x128xf32> to vector<8x128xf32>
    %25 = vector.broadcast %cst_11 : f32 to vector<8x128xf32>
    %26 = arith.select %22, %24, %25 : vector<8x128xi1>, vector<8x128xf32>
    %c1_i32 = arith.constant 1 : i32
    %27 = vector.broadcast %c1_i32 : i32 to vector<8x128xi32>
    %28 = arith.cmpi eq, %20, %27 : vector<8x128xi32>
    %cst_12 = arith.constant 0.000000e+00 : f32
    %29 = vector.shape_cast %19 : vector<1x128xf32> to vector<1x128xf32>
    %30 = vector.broadcast %29 : vector<1x128xf32> to vector<8x128xf32>
    %31 = vector.broadcast %cst_12 : f32 to vector<8x128xf32>
    %32 = arith.select %28, %30, %31 : vector<8x128xi1>, vector<8x128xf32>
    %33 = arith.addf %26, %32 : vector<8x128xf32>
    %34 = vector.shape_cast %33 : vector<8x128xf32> to vector<1x8x128xf32>
    %c0_13 = arith.constant 0 : index
    %c0_14 = arith.constant 0 : index
    %c0_15 = arith.constant 0 : index
    %35 = vector.load %arg5[%c0_13, %c0_14, %c0_15] : memref<1x8x128xf32, #tpu.memory_space<vmem>>, vector<1x8x128xf32>
    tpu.vector_store %arg5[%c0_13, %c0_14, %c0_15], %34 {strides = array<i32>} : memref<1x8x128xf32, #tpu.memory_space<vmem>>, vector<1x8x128xf32>,
    return
  }
  func.func @transform_0(%arg0: i32) -> (i32, i32) {
    %c0_i32 = arith.constant 0 : i32
    %c0_i32_0 = arith.constant 0 : i32
    return %arg0, %c0_i32 : i32, i32
  }
  func.func @transform_1(%arg0: i32) -> (i32, i32) {
    %c0_i32 = arith.constant 0 : i32
    %c0_i32_0 = arith.constant 0 : i32
    %c0_i32_1 = arith.constant 0 : i32
    return %c0_i32, %c0_i32_0 : i32, i32
  }
  func.func @transform_2(%arg0: i32) -> (i32, i32) {
    %c0_i32 = arith.constant 0 : i32
    %c0_i32_0 = arith.constant 0 : i32
    %c0_i32_1 = arith.constant 0 : i32
    return %c0_i32, %c0_i32_0 : i32, i32
  }
  func.func @transform_3(%arg0: i32) -> (i32, i32) {
    %c0_i32 = arith.constant 0 : i32
    %c0_i32_0 = arith.constant 0 : i32
    return %arg0, %c0_i32 : i32, i32
  }
  func.func @transform_4(%arg0: i32) -> (i32, i32, i32) {
    %c0_i32 = arith.constant 0 : i32
    %c0_i32_0 = arith.constant 0 : i32
    %c0_i32_1 = arith.constant 0 : i32
    return %arg0, %c0_i32, %c0_i32_0 : i32, i32, i32
  }
}

module attributes {stable_mosaic.version = 11 : i64} {
  func.func @_affine_lrelu_kernel(%arg0: i32, %arg1: memref<32x128xf32, #tpu.memory_space<vmem>>, %arg2: memref<1x128xf32, #tpu.memory_space<vmem>>, %arg3: memref<1x128xf32, #tpu.memory_space<vmem>>, %arg4: memref<32x128xbf16, #tpu.memory_space<vmem>>) attributes {dimension_semantics = [#tpu.dimension_semantics<parallel>], iteration_bounds = array<i64: 1>, scalar_prefetch = 0 : i64, scratch_operands = 0 : i64, tpu.core_type = #tpu.core_type<tc>, window_params = [{transform_indices = @transform_0, window_bounds = array<i64: 32, 128>}, {pipeline_mode = #tpu.pipeline_mode<synchronous>, transform_indices = @transform_1, window_bounds = array<i64: 1, 128>}, {pipeline_mode = #tpu.pipeline_mode<synchronous>, transform_indices = @transform_2, window_bounds = array<i64: 1, 128>}, {transform_indices = @transform_3, window_bounds = array<i64: 32, 128>}]} {
    %c0 = arith.constant 0 : index
    %c0_0 = arith.constant 0 : index
    %0 = vector.load %arg1[%c0, %c0_0] : memref<32x128xf32, #tpu.memory_space<vmem>>, vector<32x128xf32>
    %c0_1 = arith.constant 0 : index
    %c0_2 = arith.constant 0 : index
    %1 = vector.load %arg2[%c0_1, %c0_2] : memref<1x128xf32, #tpu.memory_space<vmem>>, vector<1x128xf32>
    %2 = vector.broadcast %1 : vector<1x128xf32> to vector<32x128xf32>
    %3 = arith.mulf %0, %2 : vector<32x128xf32>
    %c0_3 = arith.constant 0 : index
    %c0_4 = arith.constant 0 : index
    %4 = vector.load %arg3[%c0_3, %c0_4] : memref<1x128xf32, #tpu.memory_space<vmem>>, vector<1x128xf32>
    %5 = vector.broadcast %4 : vector<1x128xf32> to vector<32x128xf32>
    %6 = arith.addf %3, %5 : vector<32x128xf32>
    %cst = arith.constant 0.000000e+00 : f32
    %7 = vector.broadcast %cst : f32 to vector<32x128xf32>
    %8 = arith.cmpf oge, %6, %7 : vector<32x128xf32>
    %cst_5 = arith.constant 2.000000e-01 : f32
    %9 = vector.broadcast %cst_5 : f32 to vector<32x128xf32>
    %10 = arith.mulf %9, %6 : vector<32x128xf32>
    %11 = arith.select %8, %6, %10 : vector<32x128xi1>, vector<32x128xf32>
    %12 = arith.truncf %11 : vector<32x128xf32> to vector<32x128xbf16>
    %c0_6 = arith.constant 0 : index
    %c0_7 = arith.constant 0 : index
    %13 = vector.load %arg4[%c0_6, %c0_7] : memref<32x128xbf16, #tpu.memory_space<vmem>>, vector<32x128xbf16>
    tpu.vector_store %arg4[%c0_6, %c0_7], %12 {strides = array<i32>} : memref<32x128xbf16, #tpu.memory_space<vmem>>, vector<32x128xbf16>,
    return
  }
  func.func @transform_0(%arg0: i32) -> (i32, i32) {
    %c0_i32 = arith.constant 0 : i32
    %c0_i32_0 = arith.constant 0 : i32
    return %arg0, %c0_i32 : i32, i32
  }
  func.func @transform_1(%arg0: i32) -> (i32, i32) {
    %c0_i32 = arith.constant 0 : i32
    %c0_i32_0 = arith.constant 0 : i32
    %c0_i32_1 = arith.constant 0 : i32
    return %c0_i32, %c0_i32_0 : i32, i32
  }
  func.func @transform_2(%arg0: i32) -> (i32, i32) {
    %c0_i32 = arith.constant 0 : i32
    %c0_i32_0 = arith.constant 0 : i32
    %c0_i32_1 = arith.constant 0 : i32
    return %c0_i32, %c0_i32_0 : i32, i32
  }
  func.func @transform_3(%arg0: i32) -> (i32, i32) {
    %c0_i32 = arith.constant 0 : i32
    %c0_i32_0 = arith.constant 0 : i32
    return %arg0, %c0_i32 : i32, i32
  }
}

module attributes {stable_mosaic.version = 11 : i64} {
  func.func @_conv_matmul_kernel(%arg0: i32, %arg1: memref<16x256xbf16, #tpu.memory_space<vmem>>, %arg2: memref<256x128xbf16, #tpu.memory_space<vmem>>, %arg3: memref<1x128xf32, #tpu.memory_space<vmem>>, %arg4: memref<16x128xf32, #tpu.memory_space<vmem>>, %arg5: memref<1x8x128xf32, #tpu.memory_space<vmem>>) attributes {dimension_semantics = [#tpu.dimension_semantics<parallel>], iteration_bounds = array<i64: 2>, scalar_prefetch = 0 : i64, scratch_operands = 0 : i64, tpu.core_type = #tpu.core_type<tc>, window_params = [{transform_indices = @transform_0, window_bounds = array<i64: 16, 256>}, {pipeline_mode = #tpu.pipeline_mode<synchronous>, transform_indices = @transform_1, window_bounds = array<i64: 256, 128>}, {pipeline_mode = #tpu.pipeline_mode<synchronous>, transform_indices = @transform_2, window_bounds = array<i64: 1, 128>}, {transform_indices = @transform_3, window_bounds = array<i64: 16, 128>}, {transform_indices = @transform_4, window_bounds = array<i64: 1, 8, 128>}]} {
    %c0 = arith.constant 0 : index
    %c0_0 = arith.constant 0 : index
    %0 = vector.load %arg1[%c0, %c0_0] : memref<16x256xbf16, #tpu.memory_space<vmem>>, vector<16x256xbf16>
    %c0_1 = arith.constant 0 : index
    %c0_2 = arith.constant 0 : index
    %1 = vector.load %arg2[%c0_1, %c0_2] : memref<256x128xbf16, #tpu.memory_space<vmem>>, vector<256x128xbf16>
    %cst = arith.constant dense<0.000000e+00> : vector<16x128xf32>
    %2 = tpu.matmul %0, %1, %cst {dimension_numbers = #tpu.dot_dimension_numbers<[1], [0], [0], [1], [0, 0, 1, 1], [], []>} : vector<16x256xbf16>, vector<256x128xbf16>, vector<16x128xf32> -> vector<16x128xf32>
    %c0_3 = arith.constant 0 : index
    %c0_4 = arith.constant 0 : index
    %3 = vector.load %arg3[%c0_3, %c0_4] : memref<1x128xf32, #tpu.memory_space<vmem>>, vector<1x128xf32>
    %4 = vector.broadcast %3 : vector<1x128xf32> to vector<16x128xf32>
    %5 = arith.addf %2, %4 : vector<16x128xf32>
    %c0_5 = arith.constant 0 : index
    %c0_6 = arith.constant 0 : index
    %6 = vector.load %arg4[%c0_5, %c0_6] : memref<16x128xf32, #tpu.memory_space<vmem>>, vector<16x128xf32>
    tpu.vector_store %arg4[%c0_5, %c0_6], %5 {strides = array<i32>} : memref<16x128xf32, #tpu.memory_space<vmem>>, vector<16x128xf32>,
    %7 = tpu.iota {dimensions = array<i32: 0>} : vector<16x128xi32>
    %c16_i32 = arith.constant 16 : i32
    %8 = arith.muli %arg0, %c16_i32 : i32
    %9 = vector.broadcast %8 : i32 to vector<16x128xi32>
    %10 = arith.addi %7, %9 : vector<16x128xi32>
    %c18_i32 = arith.constant 18 : i32
    %11 = vector.broadcast %c18_i32 : i32 to vector<16x128xi32>
    %12 = arith.cmpi slt, %10, %11 : vector<16x128xi32>
    %cst_7 = arith.constant 0.000000e+00 : f32
    %13 = vector.broadcast %cst_7 : f32 to vector<16x128xf32>
    %14 = arith.select %12, %5, %13 : vector<16x128xi1>, vector<16x128xf32>
    %cst_8 = arith.constant dense<0.000000e+00> : vector<128xf32>
    %15 = vector.multi_reduction <add>, %14, %cst_8 [0] : vector<16x128xf32> to vector<128xf32>
    %16 = vector.shape_cast %15 : vector<128xf32> to vector<1x128xf32>
    %17 = arith.mulf %14, %14 : vector<16x128xf32>
    %cst_9 = arith.constant dense<0.000000e+00> : vector<128xf32>
    %18 = vector.multi_reduction <add>, %17, %cst_9 [0] : vector<16x128xf32> to vector<128xf32>
    %19 = vector.shape_cast %18 : vector<128xf32> to vector<1x128xf32>
    %20 = tpu.iota {dimensions = array<i32: 0>} : vector<8x128xi32>
    %c0_i32 = arith.constant 0 : i32
    %21 = vector.broadcast %c0_i32 : i32 to vector<8x128xi32>
    %22 = arith.cmpi eq, %20, %21 : vector<8x128xi32>
    %cst_10 = arith.constant 0.000000e+00 : f32
    %23 = vector.shape_cast %16 : vector<1x128xf32> to vector<1x128xf32>
    %24 = vector.broadcast %23 : vector<1x128xf32> to vector<8x128xf32>
    %25 = vector.broadcast %cst_10 : f32 to vector<8x128xf32>
    %26 = arith.select %22, %24, %25 : vector<8x128xi1>, vector<8x128xf32>
    %c1_i32 = arith.constant 1 : i32
    %27 = vector.broadcast %c1_i32 : i32 to vector<8x128xi32>
    %28 = arith.cmpi eq, %20, %27 : vector<8x128xi32>
    %cst_11 = arith.constant 0.000000e+00 : f32
    %29 = vector.shape_cast %19 : vector<1x128xf32> to vector<1x128xf32>
    %30 = vector.broadcast %29 : vector<1x128xf32> to vector<8x128xf32>
    %31 = vector.broadcast %cst_11 : f32 to vector<8x128xf32>
    %32 = arith.select %28, %30, %31 : vector<8x128xi1>, vector<8x128xf32>
    %33 = arith.addf %26, %32 : vector<8x128xf32>
    %34 = vector.shape_cast %33 : vector<8x128xf32> to vector<1x8x128xf32>
    %c0_12 = arith.constant 0 : index
    %c0_13 = arith.constant 0 : index
    %c0_14 = arith.constant 0 : index
    %35 = vector.load %arg5[%c0_12, %c0_13, %c0_14] : memref<1x8x128xf32, #tpu.memory_space<vmem>>, vector<1x8x128xf32>
    tpu.vector_store %arg5[%c0_12, %c0_13, %c0_14], %34 {strides = array<i32>} : memref<1x8x128xf32, #tpu.memory_space<vmem>>, vector<1x8x128xf32>,
    return
  }
  func.func @transform_0(%arg0: i32) -> (i32, i32) {
    %c0_i32 = arith.constant 0 : i32
    %c0_i32_0 = arith.constant 0 : i32
    return %arg0, %c0_i32 : i32, i32
  }
  func.func @transform_1(%arg0: i32) -> (i32, i32) {
    %c0_i32 = arith.constant 0 : i32
    %c0_i32_0 = arith.constant 0 : i32
    %c0_i32_1 = arith.constant 0 : i32
    return %c0_i32, %c0_i32_0 : i32, i32
  }
  func.func @transform_2(%arg0: i32) -> (i32, i32) {
    %c0_i32 = arith.constant 0 : i32
    %c0_i32_0 = arith.constant 0 : i32
    %c0_i32_1 = arith.constant 0 : i32
    return %c0_i32, %c0_i32_0 : i32, i32
  }
  func.func @transform_3(%arg0: i32) -> (i32, i32) {
    %c0_i32 = arith.constant 0 : i32
    %c0_i32_0 = arith.constant 0 : i32
    return %arg0, %c0_i32 : i32, i32
  }
  func.func @transform_4(%arg0: i32) -> (i32, i32, i32) {
    %c0_i32 = arith.constant 0 : i32
    %c0_i32_0 = arith.constant 0 : i32
    %c0_i32_1 = arith.constant 0 : i32
    return %arg0, %c0_i32, %c0_i32_0 : i32, i32, i32
  }
}

module attributes {stable_mosaic.version = 11 : i64} {
  func.func @_affine_lrelu_kernel(%arg0: i32, %arg1: memref<16x128xf32, #tpu.memory_space<vmem>>, %arg2: memref<1x128xf32, #tpu.memory_space<vmem>>, %arg3: memref<1x128xf32, #tpu.memory_space<vmem>>, %arg4: memref<16x128xbf16, #tpu.memory_space<vmem>>) attributes {dimension_semantics = [#tpu.dimension_semantics<parallel>], iteration_bounds = array<i64: 2>, scalar_prefetch = 0 : i64, scratch_operands = 0 : i64, tpu.core_type = #tpu.core_type<tc>, window_params = [{transform_indices = @transform_0, window_bounds = array<i64: 16, 128>}, {pipeline_mode = #tpu.pipeline_mode<synchronous>, transform_indices = @transform_1, window_bounds = array<i64: 1, 128>}, {pipeline_mode = #tpu.pipeline_mode<synchronous>, transform_indices = @transform_2, window_bounds = array<i64: 1, 128>}, {transform_indices = @transform_3, window_bounds = array<i64: 16, 128>}]} {
    %c0 = arith.constant 0 : index
    %c0_0 = arith.constant 0 : index
    %0 = vector.load %arg1[%c0, %c0_0] : memref<16x128xf32, #tpu.memory_space<vmem>>, vector<16x128xf32>
    %c0_1 = arith.constant 0 : index
    %c0_2 = arith.constant 0 : index
    %1 = vector.load %arg2[%c0_1, %c0_2] : memref<1x128xf32, #tpu.memory_space<vmem>>, vector<1x128xf32>
    %2 = vector.broadcast %1 : vector<1x128xf32> to vector<16x128xf32>
    %3 = arith.mulf %0, %2 : vector<16x128xf32>
    %c0_3 = arith.constant 0 : index
    %c0_4 = arith.constant 0 : index
    %4 = vector.load %arg3[%c0_3, %c0_4] : memref<1x128xf32, #tpu.memory_space<vmem>>, vector<1x128xf32>
    %5 = vector.broadcast %4 : vector<1x128xf32> to vector<16x128xf32>
    %6 = arith.addf %3, %5 : vector<16x128xf32>
    %cst = arith.constant 0.000000e+00 : f32
    %7 = vector.broadcast %cst : f32 to vector<16x128xf32>
    %8 = arith.cmpf oge, %6, %7 : vector<16x128xf32>
    %cst_5 = arith.constant 2.000000e-01 : f32
    %9 = vector.broadcast %cst_5 : f32 to vector<16x128xf32>
    %10 = arith.mulf %9, %6 : vector<16x128xf32>
    %11 = arith.select %8, %6, %10 : vector<16x128xi1>, vector<16x128xf32>
    %12 = arith.truncf %11 : vector<16x128xf32> to vector<16x128xbf16>
    %c0_6 = arith.constant 0 : index
    %c0_7 = arith.constant 0 : index
    %13 = vector.load %arg4[%c0_6, %c0_7] : memref<16x128xbf16, #tpu.memory_space<vmem>>, vector<16x128xbf16>
    tpu.vector_store %arg4[%c0_6, %c0_7], %12 {strides = array<i32>} : memref<16x128xbf16, #tpu.memory_space<vmem>>, vector<16x128xbf16>,
    return
  }
  func.func @transform_0(%arg0: i32) -> (i32, i32) {
    %c0_i32 = arith.constant 0 : i32
    %c0_i32_0 = arith.constant 0 : i32
    return %arg0, %c0_i32 : i32, i32
  }
  func.func @transform_1(%arg0: i32) -> (i32, i32) {
    %c0_i32 = arith.constant 0 : i32
    %c0_i32_0 = arith.constant 0 : i32
    %c0_i32_1 = arith.constant 0 : i32
    return %c0_i32, %c0_i32_0 : i32, i32
  }
  func.func @transform_2(%arg0: i32) -> (i32, i32) {
    %c0_i32 = arith.constant 0 : i32
    %c0_i32_0 = arith.constant 0 : i32
    %c0_i32_1 = arith.constant 0 : i32
    return %c0_i32, %c0_i32_0 : i32, i32
  }
  func.func @transform_3(%arg0: i32) -> (i32, i32) {
    %c0_i32 = arith.constant 0 : i32
    %c0_i32_0 = arith.constant 0 : i32
    return %arg0, %c0_i32 : i32, i32
  }
}

module attributes {stable_mosaic.version = 11 : i64} {
  func.func @_conv_matmul_kernel(%arg0: i32, %arg1: memref<8x512xbf16, #tpu.memory_space<vmem>>, %arg2: memref<512x128xbf16, #tpu.memory_space<vmem>>, %arg3: memref<1x128xf32, #tpu.memory_space<vmem>>, %arg4: memref<8x128xf32, #tpu.memory_space<vmem>>) attributes {dimension_semantics = [#tpu.dimension_semantics<parallel>], iteration_bounds = array<i64: 1>, scalar_prefetch = 0 : i64, scratch_operands = 0 : i64, tpu.core_type = #tpu.core_type<tc>, window_params = [{transform_indices = @transform_0, window_bounds = array<i64: 8, 512>}, {pipeline_mode = #tpu.pipeline_mode<synchronous>, transform_indices = @transform_1, window_bounds = array<i64: 512, 128>}, {pipeline_mode = #tpu.pipeline_mode<synchronous>, transform_indices = @transform_2, window_bounds = array<i64: 1, 128>}, {transform_indices = @transform_3, window_bounds = array<i64: 8, 128>}]} {
    %c0 = arith.constant 0 : index
    %c0_0 = arith.constant 0 : index
    %0 = vector.load %arg1[%c0, %c0_0] : memref<8x512xbf16, #tpu.memory_space<vmem>>, vector<8x512xbf16>
    %c0_1 = arith.constant 0 : index
    %c0_2 = arith.constant 0 : index
    %1 = vector.load %arg2[%c0_1, %c0_2] : memref<512x128xbf16, #tpu.memory_space<vmem>>, vector<512x128xbf16>
    %cst = arith.constant dense<0.000000e+00> : vector<8x128xf32>
    %2 = tpu.matmul %0, %1, %cst {dimension_numbers = #tpu.dot_dimension_numbers<[1], [0], [0], [1], [0, 0, 1, 1], [], []>} : vector<8x512xbf16>, vector<512x128xbf16>, vector<8x128xf32> -> vector<8x128xf32>
    %c0_3 = arith.constant 0 : index
    %c0_4 = arith.constant 0 : index
    %3 = vector.load %arg3[%c0_3, %c0_4] : memref<1x128xf32, #tpu.memory_space<vmem>>, vector<1x128xf32>
    %4 = vector.broadcast %3 : vector<1x128xf32> to vector<8x128xf32>
    %5 = arith.addf %2, %4 : vector<8x128xf32>
    %c0_5 = arith.constant 0 : index
    %c0_6 = arith.constant 0 : index
    %6 = vector.load %arg4[%c0_5, %c0_6] : memref<8x128xf32, #tpu.memory_space<vmem>>, vector<8x128xf32>
    tpu.vector_store %arg4[%c0_5, %c0_6], %5 {strides = array<i32>} : memref<8x128xf32, #tpu.memory_space<vmem>>, vector<8x128xf32>,
    return
  }
  func.func @transform_0(%arg0: i32) -> (i32, i32) {
    %c0_i32 = arith.constant 0 : i32
    %c0_i32_0 = arith.constant 0 : i32
    return %arg0, %c0_i32 : i32, i32
  }
  func.func @transform_1(%arg0: i32) -> (i32, i32) {
    %c0_i32 = arith.constant 0 : i32
    %c0_i32_0 = arith.constant 0 : i32
    %c0_i32_1 = arith.constant 0 : i32
    return %c0_i32, %c0_i32_0 : i32, i32
  }
  func.func @transform_2(%arg0: i32) -> (i32, i32) {
    %c0_i32 = arith.constant 0 : i32
    %c0_i32_0 = arith.constant 0 : i32
    %c0_i32_1 = arith.constant 0 : i32
    return %c0_i32, %c0_i32_0 : i32, i32
  }
  func.func @transform_3(%arg0: i32) -> (i32, i32) {
    %c0_i32 = arith.constant 0 : i32
    %c0_i32_0 = arith.constant 0 : i32
    return %arg0, %c0_i32 : i32, i32
  }
}

</mosaic_0001>

<llo_original>
// kernel: _lambda_.6
$region0: #{_lambda_.6}
  #allocation0 [shape = 'u32[]', space=smem, size = 0x4, offset = 0x4, fixed_abs, tag = 'smem constant byte address 0x4 - core index']
  #allocation1 [shape = 'u32[144,128]{1,0:T(1,128)}', space=vmem, size = 0x12000, scoped, tag = 'internal scratch']
  %s0 = inlined_call_operand.vmem [shape: bf16[128,48], index: 0, kind: input, shape index: {}]
  %s1 = inlined_call_operand.vmem [shape: bf16[48,128], index: 1, kind: input, shape index: {}]
  %s2 = inlined_call_operand.vmem [shape: f32[1,128], index: 2, kind: input, shape index: {}]
  %s3 = inlined_call_operand.vmem [shape: bf16[128,128], index: 3, kind: output, shape index: {}]
  %s4 = sld [smem:[#allocation0]]
  $region22: #{_lambda_.6} parent=0
    _
  %s6 = ssub.s32 1, %s4
  %s7 = scalar_select 0, %s6, %s4
  // Predicated region
  $region2: #{_lambda_.6} parent=0 // pred_check
    _
  $region3: #{_lambda_.6} parent=0 // pred_check_branch
    %9 = sbr.rel (0) target = $region5
  $region4: #{_lambda_.6} parent=0 // pred_region
    _
  $region5: #{_lambda_.6} parent=0 // pred_fallthru
    _
  // Predicated region
  $region6: #{_lambda_.6} parent=0 // pred_check
    _
  $region7: #{_lambda_.6} parent=0 // pred_check_branch
    %11 = sbr.rel (0) target = $region9
  $region8: #{_lambda_.6} parent=0 // pred_region
    _
  $region9: #{_lambda_.6} parent=0 // pred_fallthru
    _
  // Predicated region
  $region10: #{_lambda_.6} parent=0 // pred_check
    _
  $region11: #{_lambda_.6} parent=0 // pred_check_branch
    %13 = sbr.rel (0) target = $region13
  $region12: #{_lambda_.6} parent=0 // pred_region
    _
  $region13: #{_lambda_.6} parent=0 // pred_fallthru
    _
  %v15 = vld [vmem:[%s0] sm:$0xf]
  %v16 = vld [vmem:[%s0 + $0x4] sm:$0xf]
  %v17 = vld [vmem:[%s0 + $0x8] sm:$0xf]
  %v18 = vld [vmem:[%s0 + $0xc] sm:$0xf]
  %v19 = vld [vmem:[%s0 + $0x10] sm:$0xf]
  %v20 = vld [vmem:[%s0 + $0x14] sm:$0xf]
  %v21 = vld [vmem:[%s0 + $0x18] sm:$0xf]
  %v22 = vld [vmem:[%s0 + $0x1c] sm:$0xf]
  %v23 = vld [vmem:[%s0 + $0x20] sm:$0xf]
  %v24 = vld [vmem:[%s0 + $0x24] sm:$0xf]
  %v25 = vld [vmem:[%s0 + $0x28] sm:$0xf]
  %v26 = vld [vmem:[%s0 + $0x2c] sm:$0xf]
  %v27 = vld [vmem:[%s0 + $0x30] sm:$0xf]
  %v28 = vld [vmem:[%s0 + $0x34] sm:$0xf]
  %v29 = vld [vmem:[%s0 + $0x38] sm:$0xf]
  %v30 = vld [vmem:[%s0 + $0x3c] sm:$0xf]
  %v31 = vld [vmem:[%s1] sm:$0xf]
  %v32 = vld [vmem:[%s1 + $0x4] sm:$0xf]
  %v33 = vld [vmem:[%s1 + $0x8] sm:$0xf]
  %v34 = vld [vmem:[%s1 + $0xc] sm:$0xf]
  %v35 = vld [vmem:[%s1 + $0x10] sm:$0xf]
  %v36 = vld [vmem:[%s1 + $0x14] sm:$0xf]
  %v37 = vld [vmem:[%s2] sm:$0x1]
  %v39 = vlaneseq
  %v40 = vshrl.u32 %v39, 7
  %v41 = vsub.s32 0, %v40
  %v42 = vrot.slane %v37, %v41
  %v60 = vunpack.c.l.b16 %v15
  %v61 = vunpack.c.l.b16 %v16
  %v62 = vunpack.c.l.b16 %v17
  %v63 = vunpack.c.l.b16 %v18
  %v64 = vunpack.c.l.b16 %v19
  %v65 = vunpack.c.l.b16 %v20
  %v66 = vunpack.c.l.b16 %v21
  %v67 = vunpack.c.l.b16 %v22
  %v68 = vunpack.c.l.b16 %v23
  %v69 = vunpack.c.l.b16 %v24
  %v70 = vunpack.c.l.b16 %v25
  %v71 = vunpack.c.l.b16 %v26
  %v72 = vunpack.c.l.b16 %v27
  %v73 = vunpack.c.l.b16 %v28
  %v74 = vunpack.c.l.b16 %v29
  %v75 = vunpack.c.l.b16 %v30
  %v76 = vpack.c.b16 %v61, %v60
  %v77 = vpack.c.b16 %v63, %v62
  %v78 = vpack.c.b16 %v65, %v64
  %v79 = vpack.c.b16 %v67, %v66
  %v80 = vpack.c.b16 %v69, %v68
  %v81 = vpack.c.b16 %v71, %v70
  %v82 = vpack.c.b16 %v73, %v72
  %v83 = vpack.c.b16 %v75, %v74
  %v90 = vunpack.c.l.b16 %v31
  %v91 = vunpack.c.l.b16 %v32
  %v92 = vunpack.c.l.b16 %v33
  %v93 = vunpack.c.l.b16 %v34
  %v94 = vunpack.c.l.b16 %v35
  %v95 = vunpack.c.l.b16 %v36
  %v96 = vpack.c.b16 %v91, %v90
  %v97 = vpack.c.b16 %v93, %v92
  %v98 = vpack.c.b16 %v95, %v94
  %vm102 = vcmask 392192
  %v104 = vsel %vm102, %v76, 0
  %v107 = vsel %vm102, %v77, 0
  %v110 = vsel %vm102, %v78, 0
  %v113 = vsel %vm102, %v79, 0
  %v116 = vsel %vm102, %v80, 0
  %v119 = vsel %vm102, %v81, 0
  %v122 = vsel %vm102, %v82, 0
  %v125 = vsel %vm102, %v83, 0
  %127 = vmatprep.subr.bf16.mxu0 0
  %128 = vmatpush1.bf16.msra.mxu0 %v96
  %129 = vmatprep.subr.bf16.mxu0 0
  %130 = vmatpush1.bf16.msra.mxu0 %v97
  %131 = vmatprep.subr.bf16.mxu0 0
  %132 = vmatpush1.bf16.msra.mxu0 %v98
  %133 = vmatprep.subr.bf16.mxu0 0
  %134 = vmatpush1.bf16.msra.mxu0 0
  %135 = vmatprep.subr.bf16.mxu0 0
  %136 = vmatpush1.bf16.msra.mxu0 0
  %137 = vmatprep.subr.bf16.mxu0 0
  %138 = vmatpush1.bf16.msra.mxu0 0
  %139 = vmatprep.subr.bf16.mxu0 0
  %140 = vmatpush1.bf16.msra.mxu0 0
  %141 = vmatprep.subr.bf16.mxu0 0
  %142 = vmatpush1.bf16.msra.mxu0 0
  %143 = vmatprep.subr.bf16.mxu0 0
  %144 = vmatpush1.bf16.msra.mxu0 0
  %145 = vmatprep.subr.bf16.mxu0 0
  %146 = vmatpush1.bf16.msra.mxu0 0
  %147 = vmatprep.subr.bf16.mxu0 0
  %148 = vmatpush1.bf16.msra.mxu0 0
  %149 = vmatprep.subr.bf16.mxu0 0
  %150 = vmatpush1.bf16.msra.mxu0 0
  %151 = vmatprep.subr.bf16.mxu0 0
  %152 = vmatpush1.bf16.msra.mxu0 0
  %153 = vmatprep.subr.bf16.mxu0 0
  %154 = vmatpush1.bf16.msra.mxu0 0
  %155 = vmatprep.subr.bf16.mxu0 0
  %156 = vmatpush1.bf16.msra.mxu0 0
  %157 = vmatprep.subr.bf16.mxu0 0
  %158 = vmatpush1.bf16.msra.mxu0 0
  %159 = vmatprep.mubr.bf16.mxu0 0
  %160 = vmatmul.mubr.bf16.gmra.mrb[0].mxu0 %v104
  %v161 = vpop.f32.mrb[0].mxu0
  %v162 = vadd.f32 %v42, %v161
  %v163 = vpop.f32.mrb[0].mxu0
  %v164 = vpop.f32.mrb[0].mxu0
  %v165 = vadd.f32 %v42, %v164
  %v166 = vpop.f32.mrb[0].mxu0
  %167 = vmatprep.mubr.bf16.mxu0 0
  %168 = vmatmul.mubr.bf16.gmra.mrb[0].mxu0 %v107
  %v169 = vpop.f32.mrb[0].mxu0
  %v170 = vadd.f32 %v42, %v169
  %v171 = vpop.f32.mrb[0].mxu0
  %v172 = vpop.f32.mrb[0].mxu0
  %v173 = vadd.f32 %v42, %v172
  %v174 = vpop.f32.mrb[0].mxu0
  %175 = vmatprep.mubr.bf16.mxu0 0
  %176 = vmatmul.mubr.bf16.gmra.mrb[0].mxu0 %v110
  %v177 = vpop.f32.mrb[0].mxu0
  %v178 = vadd.f32 %v42, %v177
  %v179 = vpop.f32.mrb[0].mxu0
  %v180 = vpop.f32.mrb[0].mxu0
  %v181 = vadd.f32 %v42, %v180
  %v182 = vpop.f32.mrb[0].mxu0
  %183 = vmatprep.mubr.bf16.mxu0 0
  %184 = vmatmul.mubr.bf16.gmra.mrb[0].mxu0 %v113
  %v185 = vpop.f32.mrb[0].mxu0
  %v186 = vadd.f32 %v42, %v185
  %v187 = vpop.f32.mrb[0].mxu0
  %v188 = vpop.f32.mrb[0].mxu0
  %v189 = vadd.f32 %v42, %v188
  %v190 = vpop.f32.mrb[0].mxu0
  %191 = vmatprep.mubr.bf16.mxu0 0
  %192 = vmatmul.mubr.bf16.gmra.mrb[0].mxu0 %v116
  %v193 = vpop.f32.mrb[0].mxu0
  %v194 = vadd.f32 %v42, %v193
  %v195 = vpop.f32.mrb[0].mxu0
  %v196 = vpop.f32.mrb[0].mxu0
  %v197 = vadd.f32 %v42, %v196
  %v198 = vpop.f32.mrb[0].mxu0
  %199 = vmatprep.mubr.bf16.mxu0 0
  %200 = vmatmul.mubr.bf16.gmra.mrb[0].mxu0 %v119
  %v201 = vpop.f32.mrb[0].mxu0
  %v202 = vadd.f32 %v42, %v201
  %v203 = vpop.f32.mrb[0].mxu0
  %v204 = vpop.f32.mrb[0].mxu0
  %v205 = vadd.f32 %v42, %v204
  %v206 = vpop.f32.mrb[0].mxu0
  %207 = vmatprep.mubr.bf16.mxu0 0
  %208 = vmatmul.mubr.bf16.gmra.mrb[0].mxu0 %v122
  %v209 = vpop.f32.mrb[0].mxu0
  %v210 = vadd.f32 %v42, %v209
  %v211 = vpop.f32.mrb[0].mxu0
  %v212 = vpop.f32.mrb[0].mxu0
  %v213 = vadd.f32 %v42, %v212
  %v214 = vpop.f32.mrb[0].mxu0
  %215 = vmatprep.mubr.bf16.mxu0 0
  %216 = vmatmul.mubr.bf16.gmra.mrb[0].mxu0 %v125
  %v217 = vpop.f32.mrb[0].mxu0
  %v218 = vadd.f32 %v42, %v217
  %v219 = vpop.f32.mrb[0].mxu0
  %v220 = vpop.f32.mrb[0].mxu0
  %v221 = vadd.f32 %v42, %v220
  %v222 = vpop.f32.mrb[0].mxu0
  %223 = vdwg.mxu0
  %vm224 = vcmp.ge.f32.partialorder %v162, 0.0
  %vm225 = vcmp.ge.f32.partialorder %v165, 0.0
  %vm226 = vcmp.ge.f32.partialorder %v170, 0.0
  %vm227 = vcmp.ge.f32.partialorder %v173, 0.0
  %vm228 = vcmp.ge.f32.partialorder %v178, 0.0
  %vm229 = vcmp.ge.f32.partialorder %v181, 0.0
  %vm230 = vcmp.ge.f32.partialorder %v186, 0.0
  %vm231 = vcmp.ge.f32.partialorder %v189, 0.0
  %vm232 = vcmp.ge.f32.partialorder %v194, 0.0
  %vm233 = vcmp.ge.f32.partialorder %v197, 0.0
  %vm234 = vcmp.ge.f32.partialorder %v202, 0.0
  %vm235 = vcmp.ge.f32.partialorder %v205, 0.0
  %vm236 = vcmp.ge.f32.partialorder %v210, 0.0
  %vm237 = vcmp.ge.f32.partialorder %v213, 0.0
  %vm238 = vcmp.ge.f32.partialorder %v218, 0.0
  %vm239 = vcmp.ge.f32.partialorder %v221, 0.0
  %v240 = vmul.f32 %v162, 0.2
  %v241 = vmul.f32 %v165, 0.2
  %v242 = vmul.f32 %v170, 0.2
  %v243 = vmul.f32 %v173, 0.2
  %v244 = vmul.f32 %v178, 0.2
  %v245 = vmul.f32 %v181, 0.2
  %v246 = vmul.f32 %v186, 0.2
  %v247 = vmul.f32 %v189, 0.2
  %v248 = vmul.f32 %v194, 0.2
  %v249 = vmul.f32 %v197, 0.2
  %v250 = vmul.f32 %v202, 0.2
  %v251 = vmul.f32 %v205, 0.2
  %v252 = vmul.f32 %v210, 0.2
  %v253 = vmul.f32 %v213, 0.2
  %v254 = vmul.f32 %v218, 0.2
  %v255 = vmul.f32 %v221, 0.2
  %v256 = vsel %vm224, %v162, %v240
  %v257 = vsel %vm225, %v165, %v241
  %v258 = vsel %vm226, %v170, %v242
  %v259 = vsel %vm227, %v173, %v243
  %v260 = vsel %vm228, %v178, %v244
  %v261 = vsel %vm229, %v181, %v245
  %v262 = vsel %vm230, %v186, %v246
  %v263 = vsel %vm231, %v189, %v247
  %v264 = vsel %vm232, %v194, %v248
  %v265 = vsel %vm233, %v197, %v249
  %v266 = vsel %vm234, %v202, %v250
  %v267 = vsel %vm235, %v205, %v251
  %v268 = vsel %vm236, %v210, %v252
  %v269 = vsel %vm237, %v213, %v253
  %v270 = vsel %vm238, %v218, %v254
  %v271 = vsel %vm239, %v221, %v255
  %v272 = vpack.c.bf16 %v257, %v256
  %v273 = vpack.c.bf16 %v259, %v258
  %v274 = vpack.c.bf16 %v261, %v260
  %v275 = vpack.c.bf16 %v263, %v262
  %v276 = vpack.c.bf16 %v265, %v264
  %v277 = vpack.c.bf16 %v267, %v266
  %v278 = vpack.c.bf16 %v269, %v268
  %v279 = vpack.c.bf16 %v271, %v270
  %v288 = vunpack.c.l.b16 %v272
  %v289 = vunpack.c.h.b16 %v272
  %v290 = vunpack.c.l.b16 %v273
  %v291 = vunpack.c.h.b16 %v273
  %v292 = vunpack.c.l.b16 %v274
  %v293 = vunpack.c.h.b16 %v274
  %v294 = vunpack.c.l.b16 %v275
  %v295 = vunpack.c.h.b16 %v275
  %v296 = vunpack.c.l.b16 %v276
  %v297 = vunpack.c.h.b16 %v276
  %v298 = vunpack.c.l.b16 %v277
  %v299 = vunpack.c.h.b16 %v277
  %v300 = vunpack.c.l.b16 %v278
  %v301 = vunpack.c.h.b16 %v278
  %v302 = vunpack.c.l.b16 %v279
  %v303 = vunpack.c.h.b16 %v279
  %v304 = vpack.c.b16 %v288, %v288
  %v305 = vpack.c.b16 %v289, %v289
  %v306 = vpack.c.b16 %v290, %v290
  %v307 = vpack.c.b16 %v291, %v291
  %v308 = vpack.c.b16 %v292, %v292
  %v309 = vpack.c.b16 %v293, %v293
  %v310 = vpack.c.b16 %v294, %v294
  %v311 = vpack.c.b16 %v295, %v295
  %v312 = vpack.c.b16 %v296, %v296
  %v313 = vpack.c.b16 %v297, %v297
  %v314 = vpack.c.b16 %v298, %v298
  %v315 = vpack.c.b16 %v299, %v299
  %v316 = vpack.c.b16 %v300, %v300
  %v317 = vpack.c.b16 %v301, %v301
  %v318 = vpack.c.b16 %v302, %v302
  %v319 = vpack.c.b16 %v303, %v303
  %336 = vst [vmem:[%s3] sm:$0xf] %v304
  %337 = vst [vmem:[%s3 + $0x4] sm:$0xf] %v305
  %338 = vst [vmem:[%s3 + $0x8] sm:$0xf] %v306
  %339 = vst [vmem:[%s3 + $0xc] sm:$0xf] %v307
  %340 = vst [vmem:[%s3 + $0x10] sm:$0xf] %v308
  %341 = vst [vmem:[%s3 + $0x14] sm:$0xf] %v309
  %342 = vst [vmem:[%s3 + $0x18] sm:$0xf] %v310
  %343 = vst [vmem:[%s3 + $0x1c] sm:$0xf] %v311
  %344 = vst [vmem:[%s3 + $0x20] sm:$0xf] %v312
  %345 = vst [vmem:[%s3 + $0x24] sm:$0xf] %v313
  %346 = vst [vmem:[%s3 + $0x28] sm:$0xf] %v314
  %347 = vst [vmem:[%s3 + $0x2c] sm:$0xf] %v315
  %348 = vst [vmem:[%s3 + $0x30] sm:$0xf] %v316
  %349 = vst [vmem:[%s3 + $0x34] sm:$0xf] %v317
  %350 = vst [vmem:[%s3 + $0x38] sm:$0xf] %v318
  %351 = vst [vmem:[%s3 + $0x3c] sm:$0xf] %v319
  // Predicated region
  $region14: #{_lambda_.6} parent=0 // pred_check
    _
  $region15: #{_lambda_.6} parent=0 // pred_check_branch
    %353 = sbr.rel (0) target = $region17
  $region16: #{_lambda_.6} parent=0 // pred_region
    _
  $region17: #{_lambda_.6} parent=0 // pred_fallthru
    _
  // Predicated region
  $region18: #{_lambda_.6} parent=0 // pred_check
    _
  $region19: #{_lambda_.6} parent=0 // pred_check_branch
    %355 = sbr.rel (0) target = $region21
  $region20: #{_lambda_.6} parent=0 // pred_region
    _
  $region21: #{_lambda_.6} parent=0 // pred_fallthru
    _

// kernel: _lambda_.7
$region0: #{_lambda_.7}
  #allocation0 [shape = 'u32[]', space=smem, size = 0x4, offset = 0x4, fixed_abs, tag = 'smem constant byte address 0x4 - core index']
  #allocation1 [shape = 'u32[144,128]{1,0:T(1,128)}', space=vmem, size = 0x12000, scoped, tag = 'internal scratch']
  %s0 = inlined_call_operand.vmem [shape: bf16[32,128], index: 0, kind: input, shape index: {}]
  %s1 = inlined_call_operand.vmem [shape: bf16[128,128], index: 1, kind: input, shape index: {}]
  %s2 = inlined_call_operand.vmem [shape: f32[1,128], index: 2, kind: input, shape index: {}]
  %s3 = inlined_call_operand.vmem [shape: f32[32,128], index: 3, kind: output, shape index: {0}]
  %s4 = inlined_call_operand.vmem [shape: f32[1,8,128], index: 4, kind: output, shape index: {1}]
  %5 = xla_tuple %s3, %s4
  %s6 = sld [smem:[#allocation0]]
  $region30: #{_lambda_.7} parent=0
    _
  %s8 = ssub.s32 1, %s6
  %s9 = scalar_select 0, %s8, %s6
  // Predicated region
  $region2: #{_lambda_.7} parent=0 // pred_check
    _
  $region3: #{_lambda_.7} parent=0 // pred_check_branch
    %11 = sbr.rel (0) target = $region5
  $region4: #{_lambda_.7} parent=0 // pred_region
    _
  $region5: #{_lambda_.7} parent=0 // pred_fallthru
    _
  // Predicated region
  $region6: #{_lambda_.7} parent=0 // pred_check
    _
  $region7: #{_lambda_.7} parent=0 // pred_check_branch
    %13 = sbr.rel (0) target = $region9
  $region8: #{_lambda_.7} parent=0 // pred_region
    _
  $region9: #{_lambda_.7} parent=0 // pred_fallthru
    _
  // Predicated region
  $region10: #{_lambda_.7} parent=0 // pred_check
    _
  $region11: #{_lambda_.7} parent=0 // pred_check_branch
    %15 = sbr.rel (0) target = $region13
  $region12: #{_lambda_.7} parent=0 // pred_region
    _
  $region13: #{_lambda_.7} parent=0 // pred_fallthru
    _
  %v17 = vld [vmem:[%s0] sm:$0xf]
  %v18 = vld [vmem:[%s0 + $0x4] sm:$0xf]
  %v19 = vld [vmem:[%s0 + $0x8] sm:$0xf]
  %v20 = vld [vmem:[%s0 + $0xc] sm:$0xf]
  %v21 = vld [vmem:[%s1] sm:$0xf]
  %v22 = vld [vmem:[%s1 + $0x4] sm:$0xf]
  %v23 = vld [vmem:[%s1 + $0x8] sm:$0xf]
  %v24 = vld [vmem:[%s1 + $0xc] sm:$0xf]
  %v25 = vld [vmem:[%s1 + $0x10] sm:$0xf]
  %v26 = vld [vmem:[%s1 + $0x14] sm:$0xf]
  %v27 = vld [vmem:[%s1 + $0x18] sm:$0xf]
  %v28 = vld [vmem:[%s1 + $0x1c] sm:$0xf]
  %v29 = vld [vmem:[%s1 + $0x20] sm:$0xf]
  %v30 = vld [vmem:[%s1 + $0x24] sm:$0xf]
  %v31 = vld [vmem:[%s1 + $0x28] sm:$0xf]
  %v32 = vld [vmem:[%s1 + $0x2c] sm:$0xf]
  %v33 = vld [vmem:[%s1 + $0x30] sm:$0xf]
  %v34 = vld [vmem:[%s1 + $0x34] sm:$0xf]
  %v35 = vld [vmem:[%s1 + $0x38] sm:$0xf]
  %v36 = vld [vmem:[%s1 + $0x3c] sm:$0xf]
  %v37 = vld [vmem:[%s2] sm:$0x1]
  %v39 = vlaneseq
  %v40 = vshrl.u32 %v39, 7
  %v41 = vsub.s32 0, %v40
  %v42 = vrot.slane %v37, %v41
  %v48 = vunpack.c.l.b16 %v17
  %v49 = vunpack.c.l.b16 %v18
  %v50 = vunpack.c.l.b16 %v19
  %v51 = vunpack.c.l.b16 %v20
  %v52 = vpack.c.b16 %v49, %v48
  %v53 = vpack.c.b16 %v51, %v50
  %v72 = vunpack.c.l.b16 %v21
  %v73 = vunpack.c.l.b16 %v22
  %v74 = vunpack.c.l.b16 %v23
  %v75 = vunpack.c.l.b16 %v24
  %v76 = vunpack.c.l.b16 %v25
  %v77 = vunpack.c.l.b16 %v26
  %v78 = vunpack.c.l.b16 %v27
  %v79 = vunpack.c.l.b16 %v28
  %v80 = vunpack.c.l.b16 %v29
  %v81 = vunpack.c.l.b16 %v30
  %v82 = vunpack.c.l.b16 %v31
  %v83 = vunpack.c.l.b16 %v32
  %v84 = vunpack.c.l.b16 %v33
  %v85 = vunpack.c.l.b16 %v34
  %v86 = vunpack.c.l.b16 %v35
  %v87 = vunpack.c.l.b16 %v36
  %v88 = vpack.c.b16 %v73, %v72
  %v89 = vpack.c.b16 %v75, %v74
  %v90 = vpack.c.b16 %v77, %v76
  %v91 = vpack.c.b16 %v79, %v78
  %v92 = vpack.c.b16 %v81, %v80
  %v93 = vpack.c.b16 %v83, %v82
  %v94 = vpack.c.b16 %v85, %v84
  %v95 = vpack.c.b16 %v87, %v86
  %104 = vmatprep.subr.bf16.mxu0 0
  %105 = vmatpush1.bf16.msra.mxu0 %v88
  %106 = vmatprep.subr.bf16.mxu0 0
  %107 = vmatpush1.bf16.msra.mxu0 %v89
  %108 = vmatprep.subr.bf16.mxu0 0
  %109 = vmatpush1.bf16.msra.mxu0 %v90
  %110 = vmatprep.subr.bf16.mxu0 0
  %111 = vmatpush1.bf16.msra.mxu0 %v91
  %112 = vmatprep.subr.bf16.mxu0 0
  %113 = vmatpush1.bf16.msra.mxu0 %v92
  %114 = vmatprep.subr.bf16.mxu0 0
  %115 = vmatpush1.bf16.msra.mxu0 %v93
  %116 = vmatprep.subr.bf16.mxu0 0
  %117 = vmatpush1.bf16.msra.mxu0 %v94
  %118 = vmatprep.subr.bf16.mxu0 0
  %119 = vmatpush1.bf16.msra.mxu0 %v95
  %120 = vmatprep.subr.bf16.mxu0 0
  %121 = vmatpush1.bf16.msra.mxu0 0
  %122 = vmatprep.subr.bf16.mxu0 0
  %123 = vmatpush1.bf16.msra.mxu0 0
  %124 = vmatprep.subr.bf16.mxu0 0
  %125 = vmatpush1.bf16.msra.mxu0 0
  %126 = vmatprep.subr.bf16.mxu0 0
  %127 = vmatpush1.bf16.msra.mxu0 0
  %128 = vmatprep.subr.bf16.mxu0 0
  %129 = vmatpush1.bf16.msra.mxu0 0
  %130 = vmatprep.subr.bf16.mxu0 0
  %131 = vmatpush1.bf16.msra.mxu0 0
  %132 = vmatprep.subr.bf16.mxu0 0
  %133 = vmatpush1.bf16.msra.mxu0 0
  %134 = vmatprep.subr.bf16.mxu0 0
  %135 = vmatpush1.bf16.msra.mxu0 0
  %136 = vmatprep.mubr.bf16.mxu0 0
  %137 = vmatmul.mubr.bf16.gmra.mrb[0].mxu0 %v52
  %v138 = vpop.f32.mrb[0].mxu0
  %v139 = vadd.f32 %v42, %v138
  %v140 = vpop.f32.mrb[0].mxu0
  %v141 = vpop.f32.mrb[0].mxu0
  %v142 = vadd.f32 %v42, %v141
  %v143 = vpop.f32.mrb[0].mxu0
  %144 = vmatprep.mubr.bf16.mxu0 0
  %145 = vmatmul.mubr.bf16.gmra.mrb[0].mxu0 %v53
  %v146 = vpop.f32.mrb[0].mxu0
  %v147 = vadd.f32 %v42, %v146
  %v148 = vpop.f32.mrb[0].mxu0
  %v149 = vpop.f32.mrb[0].mxu0
  %v150 = vadd.f32 %v42, %v149
  %v151 = vpop.f32.mrb[0].mxu0
  %152 = vdwg.mxu0
  %153 = vst [vmem:[%s3] sm:$0xff] %v139
  %154 = vst [vmem:[%s3 + $0x8] sm:$0xff] %v142
  %155 = vst [vmem:[%s3 + $0x10] sm:$0xff] %v147
  %156 = vst [vmem:[%s3 + $0x18] sm:$0xff] %v150
  %v157 = vlaneseq
  %v158 = vshrl.u32 %v157, 7
  %v159 = vadd.s32 %v158, 8
  %v160 = vadd.s32 %v158, 16
  %v161 = vadd.s32 %v158, 24
  %s162 = smul.u32 0, 32
  %v163 = vstv %s162
  %v164 = vadd.s32 %v158, %v163
  %v165 = vadd.s32 %v159, %v163
  %v166 = vadd.s32 %v160, %v163
  %v167 = vadd.s32 %v161, %v163
  %vm168 = vcmp.lt.s32.totalorder %v164, 32
  %vm169 = vcmp.lt.s32.totalorder %v165, 32
  %vm170 = vcmp.lt.s32.totalorder %v166, 32
  %vm171 = vcmp.lt.s32.totalorder %v167, 32
  %v172 = vsel %vm168, %v139, 0.0
  %v173 = vsel %vm169, %v142, 0.0
  %v174 = vsel %vm170, %v147, 0.0
  %v175 = vsel %vm171, %v150, 0.0
  %v176 = vadd.f32 %v172, %v173
  %v177 = vadd.f32 %v176, %v174
  %v178 = vadd.f32 %v177, %v175
  %v179 = vrot.slane %v178, 4
  %v180 = vadd.f32 %v178, %v179
  %v181 = vrot.slane %v180, 2
  %v182 = vadd.f32 %v180, %v181
  %v183 = vrot.slane %v182, 1
  %v184 = vadd.f32 %v182, %v183
  %v185 = vmul.f32 %v172, %v172
  %v186 = vmul.f32 %v173, %v173
  %v187 = vmul.f32 %v174, %v174
  %v188 = vmul.f32 %v175, %v175
  %v189 = vadd.f32 %v185, %v186
  %v190 = vadd.f32 %v189, %v187
  %v191 = vadd.f32 %v190, %v188
  %v192 = vrot.slane %v191, 4
  %v193 = vadd.f32 %v191, %v192
  %v194 = vrot.slane %v193, 2
  %v195 = vadd.f32 %v193, %v194
  %v196 = vrot.slane %v195, 1
  %v197 = vadd.f32 %v195, %v196
  %vm198 = vcmp.eq.s32.totalorder %v158, 0
  %v199 = vsel %vm198, %v184, 0.0
  %vm200 = vcmp.eq.s32.totalorder %v158, 1
  %v201 = vsel %vm200, %v197, 0.0
  %v202 = vadd.f32 %v199, %v201
  %203 = vst [vmem:[%s4] sm:$0xff] %v202
  // Predicated region
  $region14: #{_lambda_.7} parent=0 // pred_check
    _
  $region15: #{_lambda_.7} parent=0 // pred_check_branch
    %205 = sbr.rel (0) target = $region17
  $region16: #{_lambda_.7} parent=0 // pred_region
    _
  $region17: #{_lambda_.7} parent=0 // pred_fallthru
    _
  // Predicated region
  $region18: #{_lambda_.7} parent=0 // pred_check
    _
  $region19: #{_lambda_.7} parent=0 // pred_check_branch
    %207 = sbr.rel (0) target = $region21
  $region20: #{_lambda_.7} parent=0 // pred_region
    _
  $region21: #{_lambda_.7} parent=0 // pred_fallthru
    _
  // Predicated region
  $region22: #{_lambda_.7} parent=0 // pred_check
    _
  $region23: #{_lambda_.7} parent=0 // pred_check_branch
    %209 = sbr.rel (0) target = $region25
  $region24: #{_lambda_.7} parent=0 // pred_region
    _
  $region25: #{_lambda_.7} parent=0 // pred_fallthru
    _
  // Predicated region
  $region26: #{_lambda_.7} parent=0 // pred_check
    _
  $region27: #{_lambda_.7} parent=0 // pred_check_branch
    %211 = sbr.rel (0) target = $region29
  $region28: #{_lambda_.7} parent=0 // pred_region
    _
  $region29: #{_lambda_.7} parent=0 // pred_fallthru
    _

// kernel: _lambda_.8
$region0: #{_lambda_.8}
  #allocation0 [shape = 'u32[]', space=smem, size = 0x4, offset = 0x4, fixed_abs, tag = 'smem constant byte address 0x4 - core index']
  #allocation1 [shape = 'u32[144,128]{1,0:T(1,128)}', space=vmem, size = 0x12000, scoped, tag = 'internal scratch']
  %s0 = inlined_call_operand.vmem [shape: f32[32,128], index: 0, kind: input, shape index: {}]
  %s1 = inlined_call_operand.vmem [shape: f32[1,128], index: 1, kind: input, shape index: {}]
  %s2 = inlined_call_operand.vmem [shape: f32[1,128], index: 2, kind: input, shape index: {}]
  %s3 = inlined_call_operand.vmem [shape: bf16[32,128], index: 3, kind: output, shape index: {}]
  %s4 = sld [smem:[#allocation0]]
  $region22: #{_lambda_.8} parent=0
    _
  %s6 = ssub.s32 1, %s4
  %s7 = scalar_select 0, %s6, %s4
  // Predicated region
  $region2: #{_lambda_.8} parent=0 // pred_check
    _
  $region3: #{_lambda_.8} parent=0 // pred_check_branch
    %9 = sbr.rel (0) target = $region5
  $region4: #{_lambda_.8} parent=0 // pred_region
    _
  $region5: #{_lambda_.8} parent=0 // pred_fallthru
    _
  // Predicated region
  $region6: #{_lambda_.8} parent=0 // pred_check
    _
  $region7: #{_lambda_.8} parent=0 // pred_check_branch
    %11 = sbr.rel (0) target = $region9
  $region8: #{_lambda_.8} parent=0 // pred_region
    _
  $region9: #{_lambda_.8} parent=0 // pred_fallthru
    _
  // Predicated region
  $region10: #{_lambda_.8} parent=0 // pred_check
    _
  $region11: #{_lambda_.8} parent=0 // pred_check_branch
    %13 = sbr.rel (0) target = $region13
  $region12: #{_lambda_.8} parent=0 // pred_region
    _
  $region13: #{_lambda_.8} parent=0 // pred_fallthru
    _
  %v14 = vld [vmem:[%s0] sm:$0xff]
  %v15 = vld [vmem:[%s0 + $0x8] sm:$0xff]
  %v16 = vld [vmem:[%s0 + $0x10] sm:$0xff]
  %v17 = vld [vmem:[%s0 + $0x18] sm:$0xff]
  %v18 = vld [vmem:[%s1] sm:$0x1]
  %v20 = vlaneseq
  %v21 = vshrl.u32 %v20, 7
  %v22 = vsub.s32 0, %v21
  %v23 = vrot.slane %v18, %v22
  %v25 = vmul.f32 %v14, %v23
  %v26 = vmul.f32 %v15, %v23
  %v27 = vmul.f32 %v16, %v23
  %v28 = vmul.f32 %v17, %v23
  %v29 = vld [vmem:[%s2] sm:$0x1]
  %v31 = vlaneseq
  %v32 = vshrl.u32 %v31, 7
  %v33 = vsub.s32 0, %v32
  %v34 = vrot.slane %v29, %v33
  %v36 = vadd.f32 %v25, %v34
  %v37 = vadd.f32 %v26, %v34
  %v38 = vadd.f32 %v27, %v34
  %v39 = vadd.f32 %v28, %v34
  %vm40 = vcmp.ge.f32.partialorder %v36, 0.0
  %vm41 = vcmp.ge.f32.partialorder %v37, 0.0
  %vm42 = vcmp.ge.f32.partialorder %v38, 0.0
  %vm43 = vcmp.ge.f32.partialorder %v39, 0.0
  %v44 = vmul.f32 %v36, 0.2
  %v45 = vmul.f32 %v37, 0.2
  %v46 = vmul.f32 %v38, 0.2
  %v47 = vmul.f32 %v39, 0.2
  %v48 = vsel %vm40, %v36, %v44
  %v49 = vsel %vm41, %v37, %v45
  %v50 = vsel %vm42, %v38, %v46
  %v51 = vsel %vm43, %v39, %v47
  %v52 = vpack.c.bf16 %v49, %v48
  %v53 = vpack.c.bf16 %v51, %v50
  %v56 = vunpack.c.l.b16 %v52
  %v57 = vunpack.c.h.b16 %v52
  %v58 = vunpack.c.l.b16 %v53
  %v59 = vunpack.c.h.b16 %v53
  %v60 = vpack.c.b16 %v56, %v56
  %v61 = vpack.c.b16 %v57, %v57
  %v62 = vpack.c.b16 %v58, %v58
  %v63 = vpack.c.b16 %v59, %v59
  %68 = vst [vmem:[%s3] sm:$0xf] %v60
  %69 = vst [vmem:[%s3 + $0x4] sm:$0xf] %v61
  %70 = vst [vmem:[%s3 + $0x8] sm:$0xf] %v62
  %71 = vst [vmem:[%s3 + $0xc] sm:$0xf] %v63
  // Predicated region
  $region14: #{_lambda_.8} parent=0 // pred_check
    _
  $region15: #{_lambda_.8} parent=0 // pred_check_branch
    %73 = sbr.rel (0) target = $region17
  $region16: #{_lambda_.8} parent=0 // pred_region
    _
  $region17: #{_lambda_.8} parent=0 // pred_fallthru
    _
  // Predicated region
  $region18: #{_lambda_.8} parent=0 // pred_check
    _
  $region19: #{_lambda_.8} parent=0 // pred_check_branch
    %75 = sbr.rel (0) target = $region21
  $region20: #{_lambda_.8} parent=0 // pred_region
    _
  $region21: #{_lambda_.8} parent=0 // pred_fallthru
    _

// kernel: _lambda_.9
$region0: #{_lambda_.9}
  #allocation0 [shape = 'u32[]', space=smem, size = 0x4, offset = 0x4, fixed_abs, tag = 'smem constant byte address 0x4 - core index']
  #allocation1 [shape = 'u32[144,128]{1,0:T(1,128)}', space=vmem, size = 0x12000, scoped, tag = 'internal scratch']
  %s0 = inlined_call_operand.vmem [shape: bf16[18,256], index: 0, kind: input, shape index: {}]
  %s1 = inlined_call_operand.vmem [shape: bf16[256,128], index: 1, kind: input, shape index: {}]
  %s2 = inlined_call_operand.vmem [shape: f32[1,128], index: 2, kind: input, shape index: {}]
  %s3 = inlined_call_operand.vmem [shape: f32[18,128], index: 3, kind: output, shape index: {0}]
  %s4 = inlined_call_operand.vmem [shape: f32[2,8,128], index: 4, kind: output, shape index: {1}]
  %5 = xla_tuple %s3, %s4
  %s6 = sld [smem:[#allocation0]]
  $region101: #{_lambda_.9} parent=0
    _
  %s8 = ssub.s32 1, %s6
  %s9 = scalar_select 0, %s8, %s6
  $region1: #{_lambda_.9} parent=0
    #allocation2 [shape = 'u8[16384]{0}', space=vmem, size = 0x4000, scoped, tag = 'output window, operand 0']
    loop: start=0, step=1, limit=4
    $region2: #{_lambda_.9} parent=1 // loop_pre_header
      _
    $region3: #{_lambda_.9} parent=1 // loop_header
      %s11 = sphi 0, %s15
      %p12 = scmp.ge.s32.totalorder %s11, 4
      %s21 = sphi 0, %s23
      %s24 = sphi 0, %s21
      %s25 = sphi 0, %s24
      %s41 = sphi 0, %s25
      %s45 = sphi 0, %s45
      %s47 = sphi 0, %s45
      %s48 = sphi 0, %s47
      %s62 = sphi 0, %s48
      %s66 = sphi 0, %s66
      %s68 = sphi 0, %s66
      %s69 = sphi 0, %s68
      %s83 = sphi 0, %s69
      %s89 = sphi 0, %s91
      %s92 = sphi 0, %s89
      %s93 = sphi 0, %s92
      %s109 = sphi 0, %s93
      %s115 = sphi 0, %s117
      %s118 = sphi 0, %s115
      %s119 = sphi 0, %s118
      %s135 = sphi 0, %s119
    $region4: #{_lambda_.9} parent=1 // loop_header_branch
      %14 = sbr.rel (%p12) target = $region8
    $region5: #{_lambda_.9} parent=1 // loop_body
      %s16 = ssub.s32 %s11, 1
      %s17 = ssub.s32 %s11, 2
      %s18 = sadd.s32 %s11, 1
      %s19 = ssub.s32 %s11, %s18
      %p20 = scmp.eq.s32.totalorder %s19, 0
      %s22 = sadd.s32 %s21, 1
      %s23 = scalar_select %p20, %s21, %s22
      %p26 = pneg %p20
      %p27 = scmp.eq.s32.totalorder %s11, 1
      %p28 = por %p26, %p27
      %p29 = scmp.ne.s32.totalorder %s21, %s24
      %p30 = scmp.eq.s32.totalorder %s11, 0
      %p31 = por %p29, %p30
      %p32 = scmp.ne.s32.totalorder %s21, %s24
      %p33 = scmp.eq.s32.totalorder %s16, 1
      %p34 = por %p32, %p33
      %p35 = scmp.ne.s32.totalorder %s24, %s25
      %p36 = scmp.eq.s32.totalorder %s16, 0
      %p37 = por %p35, %p36
      %p38 = scmp.ne.s32.totalorder %s24, %s25
      %p39 = scmp.eq.s32.totalorder %s17, 1
      %p40 = por %p38, %p39
      %p42 = scmp.ne.s32.totalorder %s25, %s41
      %p43 = scmp.eq.s32.totalorder %s17, 0
      %p44 = por %p42, %p43
      %s46 = sadd.s32 %s45, 1
      %p49 = scmp.eq.s32.totalorder %s11, 1
      %p50 = scmp.ne.s32.totalorder %s45, %s47
      %p51 = scmp.eq.s32.totalorder %s11, 0
      %p52 = por %p50, %p51
      %p53 = scmp.ne.s32.totalorder %s45, %s47
      %p54 = scmp.eq.s32.totalorder %s16, 1
      %p55 = por %p53, %p54
      %p56 = scmp.ne.s32.totalorder %s47, %s48
      %p57 = scmp.eq.s32.totalorder %s16, 0
      %p58 = por %p56, %p57
      %p59 = scmp.ne.s32.totalorder %s47, %s48
      %p60 = scmp.eq.s32.totalorder %s17, 1
      %p61 = por %p59, %p60
      %p63 = scmp.ne.s32.totalorder %s48, %s62
      %p64 = scmp.eq.s32.totalorder %s17, 0
      %p65 = por %p63, %p64
      %s67 = sadd.s32 %s66, 1
      %p70 = scmp.eq.s32.totalorder %s11, 1
      %p71 = scmp.ne.s32.totalorder %s66, %s68
      %p72 = scmp.eq.s32.totalorder %s11, 0
      %p73 = por %p71, %p72
      %p74 = scmp.ne.s32.totalorder %s66, %s68
      %p75 = scmp.eq.s32.totalorder %s16, 1
      %p76 = por %p74, %p75
      %p77 = scmp.ne.s32.totalorder %s68, %s69
      %p78 = scmp.eq.s32.totalorder %s16, 0
      %p79 = por %p77, %p78
      %p80 = scmp.ne.s32.totalorder %s68, %s69
      %p81 = scmp.eq.s32.totalorder %s17, 1
      %p82 = por %p80, %p81
      %p84 = scmp.ne.s32.totalorder %s69, %s83
      %p85 = scmp.eq.s32.totalorder %s17, 0
      %p86 = por %p84, %p85
      %s87 = ssub.s32 %s11, %s18
      %p88 = scmp.eq.s32.totalorder %s87, 0
      %s90 = sadd.s32 %s89, 1
      %s91 = scalar_select %p88, %s89, %s90
      %p94 = pneg %p88
      %p95 = scmp.eq.s32.totalorder %s11, 1
      %p96 = por %p94, %p95
      %p97 = scmp.ne.s32.totalorder %s89, %s92
      %p98 = scmp.eq.s32.totalorder %s11, 0
      %p99 = por %p97, %p98
      %p100 = scmp.ne.s32.totalorder %s89, %s92
      %p101 = scmp.eq.s32.totalorder %s16, 1
      %p102 = por %p100, %p101
      %p103 = scmp.ne.s32.totalorder %s92, %s93
      %p104 = scmp.eq.s32.totalorder %s16, 0
      %p105 = por %p103, %p104
      %p106 = scmp.ne.s32.totalorder %s92, %s93
      %p107 = scmp.eq.s32.totalorder %s17, 1
      %p108 = por %p106, %p107
      %p110 = scmp.ne.s32.totalorder %s93, %s109
      %p111 = scmp.eq.s32.totalorder %s17, 0
      %p112 = por %p110, %p111
      %s113 = ssub.s32 %s11, %s18
      %p114 = scmp.eq.s32.totalorder %s113, 0
      %s116 = sadd.s32 %s115, 1
      %s117 = scalar_select %p114, %s115, %s116
      %p120 = pneg %p114
      %p121 = scmp.eq.s32.totalorder %s11, 1
      %p122 = por %p120, %p121
      %p123 = scmp.ne.s32.totalorder %s115, %s118
      %p124 = scmp.eq.s32.totalorder %s11, 0
      %p125 = por %p123, %p124
      %p126 = scmp.ne.s32.totalorder %s115, %s118
      %p127 = scmp.eq.s32.totalorder %s16, 1
      %p128 = por %p126, %p127
      %p129 = scmp.ne.s32.totalorder %s118, %s119
      %p130 = scmp.eq.s32.totalorder %s16, 0
      %p131 = por %p129, %p130
      %p132 = scmp.ne.s32.totalorder %s118, %s119
      %p133 = scmp.eq.s32.totalorder %s17, 1
      %p134 = por %p132, %p133
      %p136 = scmp.ne.s32.totalorder %s119, %s135
      %p137 = scmp.eq.s32.totalorder %s17, 0
      %p138 = por %p136, %p137
      %p139 = scmp.le.s32.totalorder 1, %s11
      %p140 = scmp.lt.s32.totalorder %s11, 3
      %p141 = pnand %p139, %p140
      %p142 = pneg %p141
      // Predicated region
      $region9: #{_lambda_.9} parent=5 // pred_check
        _
      $region10: #{_lambda_.9} parent=5 // pred_check_branch
        %144 = sbr.rel (%p141) target = $region12
      $region11: #{_lambda_.9} parent=5 // pred_region
        %s145 = ssub.s32 %s11, 1
        // Predicated region
        $region13: #{_lambda_.9} parent=11 // pred_check
          %p146 = pneg %p58
        $region14: #{_lambda_.9} parent=11 // pred_check_branch
          %148 = sbr.rel (%p146) target = $region16
        $region15: #{_lambda_.9} parent=11 // pred_region
          _
        $region16: #{_lambda_.9} parent=11 // pred_fallthru
          _
        // Predicated region
        $region17: #{_lambda_.9} parent=11 // pred_check
          %p149 = pneg %p79
        $region18: #{_lambda_.9} parent=11 // pred_check_branch
          %151 = sbr.rel (%p149) target = $region20
        $region19: #{_lambda_.9} parent=11 // pred_region
          _
        $region20: #{_lambda_.9} parent=11 // pred_fallthru
          _
      $region12: #{_lambda_.9} parent=5 // pred_fallthru
        _
      %p152 = scmp.lt.s32.totalorder %s11, 2
      // Predicated region
      $region21: #{_lambda_.9} parent=5 // pred_check
        %p153 = pneg %p152
      $region22: #{_lambda_.9} parent=5 // pred_check_branch
        %155 = sbr.rel (%p153) target = $region24
      $region23: #{_lambda_.9} parent=5 // pred_region
        // Predicated region
        $region25: #{_lambda_.9} parent=23 // pred_check
          %p156 = pneg %p31
        $region26: #{_lambda_.9} parent=23 // pred_check_branch
          %158 = sbr.rel (%p156) target = $region28
        $region27: #{_lambda_.9} parent=23 // pred_region
          %s159 = smul.u32 2, %s11
          %s160 = ssub.s32 3, %s159
          %p161 = scmp.lt.s32.totalorder %s160, 2
          %s162 = scalar_select %p161, %s160, 2
          %s163 = smul.u32 64, %s162
          %s164 = smul.u32 %s163, 2
          %p165 = scmp.lt.s32.totalorder %s159, 2
          %s166 = scalar_select %p165, %s159, 2
          %s167 = smul.addr %s166, 2
          %s168 = smul.addr %s167, 4
          %s169 = scalar_lea.vmem %s0, %s168
          %s170 = smul.u32 2, %s11
          %s171 = ssub.s32 3, %s170
          %p172 = scmp.lt.s32.totalorder %s171, 2
          %s173 = scalar_select %p172, %s171, 2
          %s174 = smul.u32 64, %s173
          %s175 = smul.u32 %s174, 2
        $region28: #{_lambda_.9} parent=23 // pred_fallthru
          _
      $region24: #{_lambda_.9} parent=5 // pred_fallthru
        _
      %p176 = scmp.le.s32.totalorder 1, %s11
      %p177 = scmp.lt.s32.totalorder %s11, 3
      %p178 = pnand %p176, %p177
      %p179 = pneg %p178
      // Predicated region
      $region29: #{_lambda_.9} parent=5 // pred_check
        _
      $region30: #{_lambda_.9} parent=5 // pred_check_branch
        %181 = sbr.rel (%p178) target = $region32
      $region31: #{_lambda_.9} parent=5 // pred_region
        %s182 = ssub.s32 %s11, 1
        %s183 = smul.u32 2, %s16
        %s184 = ssub.s32 3, %s183
        %p185 = scmp.lt.s32.totalorder %s184, 2
        %s186 = scalar_select %p185, %s184, 2
        %s187 = smul.u32 64, %s186
        %s188 = smul.u32 %s187, 2
        %p189 = scmp.lt.s32.totalorder %s183, 2
        %s190 = scalar_select %p189, %s183, 2
        %s191 = smul.addr %s190, 2
        %s192 = smul.addr %s191, 4
        %s193 = scalar_lea.vmem %s0, %s192
        %p194 = pneg %p37
        %p195 = pneg %p34
        %p196 = pneg %p58
        %p197 = pneg %p55
        %p198 = pneg %p79
        %p199 = pneg %p76
        %p200 = pneg %p105
        %p201 = pneg %p102
        %s202 = sand.u32 %s92, 1
        %s203 = sand.u32 %s92, 1
        %s204 = smul.addr %s203, 16
        %s205 = scalar_lea.vmem [#allocation2], %s204
        %p206 = pneg %p131
        %p207 = pneg %p128
        %p208 = scmp.lt.s32.totalorder %s16, 1
        %s209 = scalar_select %p208, %s16, 1
        %s210 = smul.addr %s209, 8
        %s211 = scalar_lea.vmem %s4, %s210
        %s212 = smul.u32 2, %s16
        %s213 = ssub.s32 3, %s212
        %p214 = scmp.lt.s32.totalorder %s213, 2
        %s215 = scalar_select %p214, %s213, 2
        %s216 = smul.u32 64, %s215
        %s217 = smul.u32 %s216, 2
        %p218 = scmp.lt.s32.totalorder %s212, 2
        %s219 = scalar_select %p218, %s212, 2
        %s220 = smul.addr %s219, 2
        %s221 = smul.addr %s220, 4
        %s222 = scalar_lea.vmem %s0, %s221
        %s223 = smul.u32 2, %s16
        %s224 = ssub.s32 3, %s223
        %p225 = scmp.lt.s32.totalorder %s224, 2
        %s226 = scalar_select %p225, %s224, 2
        %s227 = smul.u32 64, %s226
        %s228 = smul.u32 %s227, 2
        %s229 = smul.u32 2, %s16
        %s230 = ssub.s32 3, %s229
        %p231 = scmp.lt.s32.totalorder %s230, 2
        %s232 = scalar_select %p231, %s230, 2
        %s233 = smul.u32 128, %s232
        %p234 = scmp.lt.s32.totalorder %s16, 1
        %s235 = scalar_select %p234, %s16, 1
        %s236 = smul.addr %s235, 8
        %s237 = scalar_lea.vmem %s4, %s236
        %v239 = vld [vmem:[%s222] sm:$0xff]
        %v240 = vld [vmem:[%s222 + $0x8] sm:$0xff]
        %v241 = vld [vmem:[%s1] sm:$0xf]
        %v242 = vld [vmem:[%s1 + $0x4] sm:$0xf]
        %v243 = vld [vmem:[%s1 + $0x8] sm:$0xf]
        %v244 = vld [vmem:[%s1 + $0xc] sm:$0xf]
        %v245 = vld [vmem:[%s1 + $0x10] sm:$0xf]
        %v246 = vld [vmem:[%s1 + $0x14] sm:$0xf]
        %v247 = vld [vmem:[%s1 + $0x18] sm:$0xf]
        %v248 = vld [vmem:[%s1 + $0x1c] sm:$0xf]
        %v249 = vld [vmem:[%s1 + $0x20] sm:$0xf]
        %v250 = vld [vmem:[%s1 + $0x24] sm:$0xf]
        %v251 = vld [vmem:[%s1 + $0x28] sm:$0xf]
        %v252 = vld [vmem:[%s1 + $0x2c] sm:$0xf]
        %v253 = vld [vmem:[%s1 + $0x30] sm:$0xf]
        %v254 = vld [vmem:[%s1 + $0x34] sm:$0xf]
        %v255 = vld [vmem:[%s1 + $0x38] sm:$0xf]
        %v256 = vld [vmem:[%s1 + $0x3c] sm:$0xf]
        %v257 = vld [vmem:[%s1 + $0x40] sm:$0xf]
        %v258 = vld [vmem:[%s1 + $0x44] sm:$0xf]
        %v259 = vld [vmem:[%s1 + $0x48] sm:$0xf]
        %v260 = vld [vmem:[%s1 + $0x4c] sm:$0xf]
        %v261 = vld [vmem:[%s1 + $0x50] sm:$0xf]
        %v262 = vld [vmem:[%s1 + $0x54] sm:$0xf]
        %v263 = vld [vmem:[%s1 + $0x58] sm:$0xf]
        %v264 = vld [vmem:[%s1 + $0x5c] sm:$0xf]
        %v265 = vld [vmem:[%s1 + $0x60] sm:$0xf]
        %v266 = vld [vmem:[%s1 + $0x64] sm:$0xf]
        %v267 = vld [vmem:[%s1 + $0x68] sm:$0xf]
        %v268 = vld [vmem:[%s1 + $0x6c] sm:$0xf]
        %v269 = vld [vmem:[%s1 + $0x70] sm:$0xf]
        %v270 = vld [vmem:[%s1 + $0x74] sm:$0xf]
        %v271 = vld [vmem:[%s1 + $0x78] sm:$0xf]
        %v272 = vld [vmem:[%s1 + $0x7c] sm:$0xf]
        %v273 = vld [vmem:[%s2] sm:$0x1]
        %v275 = vlaneseq
        %v276 = vshrl.u32 %v275, 7
        %v277 = vsub.s32 0, %v276
        %v278 = vrot.slane %v273, %v277
        %v282 = vunpack.c.l.b16 %v239
        %v283 = vunpack.c.h.b16 %v239
        %v284 = vunpack.c.l.b16 %v240
        %v285 = vunpack.c.h.b16 %v240
        %v286 = vpack.c.b16 %v284, %v282
        %v287 = vpack.c.b16 %v285, %v283
        %v322 = vunpack.c.l.b16 %v241
        %v323 = vunpack.c.l.b16 %v242
        %v324 = vunpack.c.l.b16 %v243
        %v325 = vunpack.c.l.b16 %v244
        %v326 = vunpack.c.l.b16 %v245
        %v327 = vunpack.c.l.b16 %v246
        %v328 = vunpack.c.l.b16 %v247
        %v329 = vunpack.c.l.b16 %v248
        %v330 = vunpack.c.l.b16 %v249
        %v331 = vunpack.c.l.b16 %v250
        %v332 = vunpack.c.l.b16 %v251
        %v333 = vunpack.c.l.b16 %v252
        %v334 = vunpack.c.l.b16 %v253
        %v335 = vunpack.c.l.b16 %v254
        %v336 = vunpack.c.l.b16 %v255
        %v337 = vunpack.c.l.b16 %v256
        %v338 = vunpack.c.l.b16 %v257
        %v339 = vunpack.c.l.b16 %v258
        %v340 = vunpack.c.l.b16 %v259
        %v341 = vunpack.c.l.b16 %v260
        %v342 = vunpack.c.l.b16 %v261
        %v343 = vunpack.c.l.b16 %v262
        %v344 = vunpack.c.l.b16 %v263
        %v345 = vunpack.c.l.b16 %v264
        %v346 = vunpack.c.l.b16 %v265
        %v347 = vunpack.c.l.b16 %v266
        %v348 = vunpack.c.l.b16 %v267
        %v349 = vunpack.c.l.b16 %v268
        %v350 = vunpack.c.l.b16 %v269
        %v351 = vunpack.c.l.b16 %v270
        %v352 = vunpack.c.l.b16 %v271
        %v353 = vunpack.c.l.b16 %v272
        %v354 = vpack.c.b16 %v323, %v322
        %v355 = vpack.c.b16 %v325, %v324
        %v356 = vpack.c.b16 %v327, %v326
        %v357 = vpack.c.b16 %v329, %v328
        %v358 = vpack.c.b16 %v331, %v330
        %v359 = vpack.c.b16 %v333, %v332
        %v360 = vpack.c.b16 %v335, %v334
        %v361 = vpack.c.b16 %v337, %v336
        %v362 = vpack.c.b16 %v339, %v338
        %v363 = vpack.c.b16 %v341, %v340
        %v364 = vpack.c.b16 %v343, %v342
        %v365 = vpack.c.b16 %v345, %v344
        %v366 = vpack.c.b16 %v347, %v346
        %v367 = vpack.c.b16 %v349, %v348
        %v368 = vpack.c.b16 %v351, %v350
        %v369 = vpack.c.b16 %v353, %v352
        %386 = vmatprep.subr.bf16.mxu0 0
        %387 = vmatpush1.bf16.msra.mxu0 %v354
        %388 = vmatprep.subr.bf16.mxu0 0
        %389 = vmatpush1.bf16.msra.mxu0 %v355
        %390 = vmatprep.subr.bf16.mxu0 0
        %391 = vmatpush1.bf16.msra.mxu0 %v356
        %392 = vmatprep.subr.bf16.mxu0 0
        %393 = vmatpush1.bf16.msra.mxu0 %v357
        %394 = vmatprep.subr.bf16.mxu0 0
        %395 = vmatpush1.bf16.msra.mxu0 %v358
        %396 = vmatprep.subr.bf16.mxu0 0
        %397 = vmatpush1.bf16.msra.mxu0 %v359
        %398 = vmatprep.subr.bf16.mxu0 0
        %399 = vmatpush1.bf16.msra.mxu0 %v360
        %400 = vmatprep.subr.bf16.mxu0 0
        %401 = vmatpush1.bf16.msra.mxu0 %v361
        %402 = vmatprep.subr.bf16.mxu0 0
        %403 = vmatpush1.bf16.msra.mxu0 %v362
        %404 = vmatprep.subr.bf16.mxu0 0
        %405 = vmatpush1.bf16.msra.mxu0 %v363
        %406 = vmatprep.subr.bf16.mxu0 0
        %407 = vmatpush1.bf16.msra.mxu0 %v364
        %408 = vmatprep.subr.bf16.mxu0 0
        %409 = vmatpush1.bf16.msra.mxu0 %v365
        %410 = vmatprep.subr.bf16.mxu0 0
        %411 = vmatpush1.bf16.msra.mxu0 %v366
        %412 = vmatprep.subr.bf16.mxu0 0
        %413 = vmatpush1.bf16.msra.mxu0 %v367
        %414 = vmatprep.subr.bf16.mxu0 0
        %415 = vmatpush1.bf16.msra.mxu0 %v368
        %416 = vmatprep.subr.bf16.mxu0 0
        %417 = vmatpush1.bf16.msra.mxu0 %v369
        %418 = vmatprep.mubr.bf16.mxu0 %v287
        %419 = vmatmul.mubr.bf16.gmra.mrb[0].mxu0 %v286
        %v420 = vpop.f32.mrb[0].mxu0
        %v421 = vadd.f32 %v278, %v420
        %v422 = vpop.f32.mrb[0].mxu0
        %v423 = vpop.f32.mrb[0].mxu0
        %v424 = vadd.f32 %v278, %v423
        %v425 = vpop.f32.mrb[0].mxu0
        %426 = vdwg.mxu0
        %427 = vst [vmem:[%s205] sm:$0xff] %v421
        %428 = vst [vmem:[%s205 + $0x8] sm:$0xff] %v424
        %v429 = vlaneseq
        %v430 = vshrl.u32 %v429, 7
        %v431 = vadd.s32 %v430, 8
        %s432 = smul.u32 %s16, 16
        %v433 = vstv %s432
        %v434 = vadd.s32 %v430, %v433
        %v435 = vadd.s32 %v431, %v433
        %vm436 = vcmp.lt.s32.totalorder %v434, 18
        %vm437 = vcmp.lt.s32.totalorder %v435, 18
        %v438 = vsel %vm436, %v421, 0.0
        %v439 = vsel %vm437, %v424, 0.0
        %v440 = vadd.f32 %v438, %v439
        %v441 = vrot.slane %v440, 4
        %v442 = vadd.f32 %v440, %v441
        %v443 = vrot.slane %v442, 2
        %v444 = vadd.f32 %v442, %v443
        %v445 = vrot.slane %v444, 1
        %v446 = vadd.f32 %v444, %v445
        %v447 = vmul.f32 %v438, %v438
        %v448 = vmul.f32 %v439, %v439
        %v449 = vadd.f32 %v447, %v448
        %v450 = vrot.slane %v449, 4
        %v451 = vadd.f32 %v449, %v450
        %v452 = vrot.slane %v451, 2
        %v453 = vadd.f32 %v451, %v452
        %v454 = vrot.slane %v453, 1
        %v455 = vadd.f32 %v453, %v454
        %vm456 = vcmp.eq.s32.totalorder %v430, 0
        %v457 = vsel %vm456, %v446, 0.0
        %vm458 = vcmp.eq.s32.totalorder %v430, 1
        %v459 = vsel %vm458, %v455, 0.0
        %v460 = vadd.f32 %v457, %v459
        %461 = vst [vmem:[%s237] sm:$0xff] %v460
        %s462 = sand.u32 %s92, 1
        %s463 = sand.u32 %s92, 1
        %s464 = smul.addr %s463, 16
        %s465 = scalar_lea.vmem [#allocation2], %s464
        %p466 = scmp.lt.s32.totalorder %s16, 1
        %s467 = scalar_select %p466, %s16, 1
        %s468 = smul.addr %s467, 8
        %s469 = scalar_lea.vmem %s4, %s468
        // Predicated region
        $region33: #{_lambda_.9} parent=31 // pred_check
          %p470 = pneg %p102
        $region34: #{_lambda_.9} parent=31 // pred_check_branch
          %472 = sbr.rel (%p470) target = $region36
        $region35: #{_lambda_.9} parent=31 // pred_region
          %s473 = smul.u32 2, %s16
          %s474 = ssub.s32 3, %s473
          %p475 = scmp.lt.s32.totalorder %s474, 2
          %s476 = scalar_select %p475, %s474, 2
          %s477 = smul.u32 128, %s476
          %p478 = scmp.ne.s32.totalorder 0, %s477
          %s479 = smul.addr %s473, 8
          %s480 = scalar_lea.vmem %s3, %s479
          // Predicated region
          $region37: #{_lambda_.9} parent=35 // pred_check
            %p481 = pneg %p478
          $region38: #{_lambda_.9} parent=35 // pred_check_branch
            %483 = sbr.rel (%p481) target = $region40
          $region39: #{_lambda_.9} parent=35 // pred_region
            // Predicated region
            $region41: #{_lambda_.9} parent=39 // pred_check
              _
            $region42: #{_lambda_.9} parent=39 // pred_check_branch
              %485 = sbr.rel (0) target = $region44
            $region43: #{_lambda_.9} parent=39 // pred_region
              // Predicated region
              $region63: #{_lambda_.9} parent=43 // pred_check
                _
              $region64: #{_lambda_.9} parent=43 // pred_check_branch
                %536 = sbr.rel (0) target = $region66
              $region65: #{_lambda_.9} parent=43 // pred_region
                %s537 = sshrl.u32 %s476, 1
                // While loop
                $region67: #{_lambda_.9} parent=65 // loop_pre_header
                  _
                $region68: #{_lambda_.9} parent=65 // loop_header
                  %s539 = sphi 0, %s541
                  %p540 = scmp.ge.s32.totalorder %s539, %s537
                  %s544 = sphi 0, %s553
                  %s545 = sphi %s465, %s556
                  %s546 = sphi %s480, %s557
                $region69: #{_lambda_.9} parent=65 // loop_header_branch
                  %543 = sbr.rel (%p540) target = $region73
                $region70: #{_lambda_.9} parent=65 // loop_body
                  %v547 = vld [vmem:[%s545] sm:$0xff]
                  %548 = vst [vmem:[%s546] sm:$0xff] %v547
                  %v549 = vld [vmem:[%s545 + $0x8] sm:$0xff]
                  %550 = vst [vmem:[%s546 + $0x8] sm:$0xff] %v549
                  %s551 = sadd.s32 1, %s544
                  %p552 = scmp.ge.s32.totalorder %s551, %s537
                  %s553 = scalar_select %p552, 0, %s551
                  %s554 = smul.u32 %s553, 16
                  %s555 = smul.u32 %s553, 16
                  %s556 = scalar_lea.vmem %s465, %s554 [#allocation2]
                  %s557 = scalar_lea.vmem %s480, %s555
                $region71: #{_lambda_.9} parent=65 // loop_footer
                  %s541 = sadd.s32 %s539, 1
                $region72: #{_lambda_.9} parent=65 // loop_footer_branch
                  %538 = sbr.rel target = $region68
                $region73: #{_lambda_.9} parent=65 // loop_exit
                  _
                %s558 = sshrl.u32 %s476, 1
                %s559 = sand.u32 %s476, 1
                %s560 = smul.u32 %s558, 2
                %s561 = smul.u32 8, %s560
                %s562 = scalar_lea.vmem %s465, %s561 [#allocation2]
                %s563 = smul.u32 8, %s560
                %s564 = scalar_lea.vmem %s480, %s563
                // While loop
                $region74: #{_lambda_.9} parent=65 // loop_pre_header
                  _
                $region75: #{_lambda_.9} parent=65 // loop_header
                  %s566 = sphi 0, %s568
                  %p567 = scmp.ge.s32.totalorder %s566, %s559
                  %s571 = sphi 0, %s578
                  %s572 = sphi %s562, %s581
                  %s573 = sphi %s564, %s582
                $region76: #{_lambda_.9} parent=65 // loop_header_branch
                  %570 = sbr.rel (%p567) target = $region80
                $region77: #{_lambda_.9} parent=65 // loop_body
                  %v574 = vld [vmem:[%s572] sm:$0xff]
                  %575 = vst [vmem:[%s573] sm:$0xff] %v574
                  %s576 = sadd.s32 1, %s571
                  %p577 = scmp.ge.s32.totalorder %s576, %s559
                  %s578 = scalar_select %p577, 0, %s576
                  %s579 = smul.u32 %s578, 8
                  %s580 = smul.u32 %s578, 8
                  %s581 = scalar_lea.vmem %s562, %s579 [#allocation2]
                  %s582 = scalar_lea.vmem %s564, %s580
                $region78: #{_lambda_.9} parent=65 // loop_footer
                  %s568 = sadd.s32 %s566, 1
                $region79: #{_lambda_.9} parent=65 // loop_footer_branch
                  %565 = sbr.rel target = $region75
                $region80: #{_lambda_.9} parent=65 // loop_exit
                  _
              $region66: #{_lambda_.9} parent=43 // pred_fallthru
                _
              // Predicated region
              $region81: #{_lambda_.9} parent=43 // pred_check
                _
              $region82: #{_lambda_.9} parent=43 // pred_check_branch
                %584 = sbr.rel target = $region84
              $region83: #{_lambda_.9} parent=43 // pred_region
                _
              $region84: #{_lambda_.9} parent=43 // pred_fallthru
                _
            $region44: #{_lambda_.9} parent=39 // pred_fallthru
              _
            // Predicated region
            $region45: #{_lambda_.9} parent=39 // pred_check
              _
            $region46: #{_lambda_.9} parent=39 // pred_check_branch
              %487 = sbr.rel target = $region48
            $region47: #{_lambda_.9} parent=39 // pred_region
              %s489 = sshrl.u32 %s476, 1
              // While loop
              $region49: #{_lambda_.9} parent=47 // loop_pre_header
                _
              $region50: #{_lambda_.9} parent=47 // loop_header
                %s491 = sphi 0, %s493
                %p492 = scmp.ge.s32.totalorder %s491, %s489
                %s496 = sphi 0, %s505
                %s497 = sphi %s465, %s508
                %s498 = sphi %s480, %s509
              $region51: #{_lambda_.9} parent=47 // loop_header_branch
                %495 = sbr.rel (%p492) target = $region55
              $region52: #{_lambda_.9} parent=47 // loop_body
                %v499 = vld [vmem:[%s497] sm:$0xff]
                %500 = vst [vmem:[%s498] sm:$0xff] %v499
                %v501 = vld [vmem:[%s497 + $0x8] sm:$0xff]
                %502 = vst [vmem:[%s498 + $0x8] sm:$0xff] %v501
                %s503 = sadd.s32 1, %s496
                %p504 = scmp.ge.s32.totalorder %s503, %s489
                %s505 = scalar_select %p504, 0, %s503
                %s506 = smul.u32 %s505, 16
                %s507 = smul.u32 %s505, 16
                %s508 = scalar_lea.vmem %s465, %s506 [#allocation2]
                %s509 = scalar_lea.vmem %s480, %s507
              $region53: #{_lambda_.9} parent=47 // loop_footer
                %s493 = sadd.s32 %s491, 1
              $region54: #{_lambda_.9} parent=47 // loop_footer_branch
                %490 = sbr.rel target = $region50
              $region55: #{_lambda_.9} parent=47 // loop_exit
                _
              %s510 = sshrl.u32 %s476, 1
              %s511 = sand.u32 %s476, 1
              %s512 = smul.u32 %s510, 2
              %s513 = smul.u32 8, %s512
              %s514 = scalar_lea.vmem %s465, %s513 [#allocation2]
              %s515 = smul.u32 8, %s512
              %s516 = scalar_lea.vmem %s480, %s515
              // While loop
              $region56: #{_lambda_.9} parent=47 // loop_pre_header
                _
              $region57: #{_lambda_.9} parent=47 // loop_header
                %s518 = sphi 0, %s520
                %p519 = scmp.ge.s32.totalorder %s518, %s511
                %s523 = sphi 0, %s530
                %s524 = sphi %s514, %s533
                %s525 = sphi %s516, %s534
              $region58: #{_lambda_.9} parent=47 // loop_header_branch
                %522 = sbr.rel (%p519) target = $region62
              $region59: #{_lambda_.9} parent=47 // loop_body
                %v526 = vld [vmem:[%s524] sm:$0xff]
                %527 = vst [vmem:[%s525] sm:$0xff] %v526
                %s528 = sadd.s32 1, %s523
                %p529 = scmp.ge.s32.totalorder %s528, %s511
                %s530 = scalar_select %p529, 0, %s528
                %s531 = smul.u32 %s530, 8
                %s532 = smul.u32 %s530, 8
                %s533 = scalar_lea.vmem %s514, %s531 [#allocation2]
                %s534 = scalar_lea.vmem %s516, %s532
              $region60: #{_lambda_.9} parent=47 // loop_footer
                %s520 = sadd.s32 %s518, 1
              $region61: #{_lambda_.9} parent=47 // loop_footer_branch
                %517 = sbr.rel target = $region57
              $region62: #{_lambda_.9} parent=47 // loop_exit
                _
            $region48: #{_lambda_.9} parent=39 // pred_fallthru
              _
          $region40: #{_lambda_.9} parent=35 // pred_fallthru
            _
          %585 = vnop
        $region36: #{_lambda_.9} parent=31 // pred_fallthru
          _
        // Predicated region
        $region85: #{_lambda_.9} parent=31 // pred_check
          %p586 = pneg %p128
        $region86: #{_lambda_.9} parent=31 // pred_check_branch
          %588 = sbr.rel (%p586) target = $region88
        $region87: #{_lambda_.9} parent=31 // pred_region
          _
        $region88: #{_lambda_.9} parent=31 // pred_fallthru
          _
      $region32: #{_lambda_.9} parent=5 // pred_fallthru
        _
      %p589 = scmp.le.s32.totalorder 2, %s11
      // Predicated region
      $region89: #{_lambda_.9} parent=5 // pred_check
        %p590 = pneg %p589
      $region90: #{_lambda_.9} parent=5 // pred_check_branch
        %592 = sbr.rel (%p590) target = $region92
      $region91: #{_lambda_.9} parent=5 // pred_region
        %s593 = ssub.s32 %s11, 2
        // Predicated region
        $region93: #{_lambda_.9} parent=91 // pred_check
          %p594 = pneg %p108
        $region94: #{_lambda_.9} parent=91 // pred_check_branch
          %596 = sbr.rel (%p594) target = $region96
        $region95: #{_lambda_.9} parent=91 // pred_region
          %s597 = sand.u32 %s93, 1
          %s598 = sand.u32 %s93, 1
          %s599 = smul.addr %s598, 16
          %s600 = scalar_lea.vmem [#allocation2], %s599
        $region96: #{_lambda_.9} parent=91 // pred_fallthru
          _
        // Predicated region
        $region97: #{_lambda_.9} parent=91 // pred_check
          %p601 = pneg %p134
        $region98: #{_lambda_.9} parent=91 // pred_check_branch
          %603 = sbr.rel (%p601) target = $region100
        $region99: #{_lambda_.9} parent=91 // pred_region
          %p604 = scmp.lt.s32.totalorder %s17, 1
          %s605 = scalar_select %p604, %s17, 1
          %s606 = smul.addr %s605, 8
          %s607 = scalar_lea.vmem %s4, %s606
        $region100: #{_lambda_.9} parent=91 // pred_fallthru
          _
      $region92: #{_lambda_.9} parent=5 // pred_fallthru
        _
    $region6: #{_lambda_.9} parent=1 // loop_footer
      %s15 = sadd.s32 1, %s11
    $region7: #{_lambda_.9} parent=1 // loop_footer_branch
      %10 = sbr.rel target = $region3
    $region8: #{_lambda_.9} parent=1 // loop_exit
      _

// kernel: _lambda_.10
$region0: #{_lambda_.10}
  #allocation0 [shape = 'u32[]', space=smem, size = 0x4, offset = 0x4, fixed_abs, tag = 'smem constant byte address 0x4 - core index']
  #allocation1 [shape = 'u32[144,128]{1,0:T(1,128)}', space=vmem, size = 0x12000, scoped, tag = 'internal scratch']
  %s0 = inlined_call_operand.vmem [shape: f32[18,128], index: 0, kind: input, shape index: {}]
  %s1 = inlined_call_operand.vmem [shape: f32[1,128], index: 1, kind: input, shape index: {}]
  %s2 = inlined_call_operand.vmem [shape: f32[1,128], index: 2, kind: input, shape index: {}]
  %s3 = inlined_call_operand.vmem [shape: bf16[18,128], index: 3, kind: output, shape index: {}]
  %s4 = sld [smem:[#allocation0]]
  $region89: #{_lambda_.10} parent=0
    _
  %s6 = ssub.s32 1, %s4
  %s7 = scalar_select 0, %s6, %s4
  $region1: #{_lambda_.10} parent=0
    #allocation2 [shape = 'u8[8192]{0}', space=vmem, size = 0x2000, scoped, tag = 'output window, operand 0']
    loop: start=0, step=1, limit=4
    $region2: #{_lambda_.10} parent=1 // loop_pre_header
      _
    $region3: #{_lambda_.10} parent=1 // loop_header
      %s9 = sphi 0, %s13
      %p10 = scmp.ge.s32.totalorder %s9, 4
      %s19 = sphi 0, %s21
      %s22 = sphi 0, %s19
      %s23 = sphi 0, %s22
      %s39 = sphi 0, %s23
      %s43 = sphi 0, %s43
      %s45 = sphi 0, %s43
      %s46 = sphi 0, %s45
      %s60 = sphi 0, %s46
      %s64 = sphi 0, %s64
      %s66 = sphi 0, %s64
      %s67 = sphi 0, %s66
      %s81 = sphi 0, %s67
      %s87 = sphi 0, %s89
      %s90 = sphi 0, %s87
      %s91 = sphi 0, %s90
      %s107 = sphi 0, %s91
    $region4: #{_lambda_.10} parent=1 // loop_header_branch
      %12 = sbr.rel (%p10) target = $region8
    $region5: #{_lambda_.10} parent=1 // loop_body
      %s14 = ssub.s32 %s9, 1
      %s15 = ssub.s32 %s9, 2
      %s16 = sadd.s32 %s9, 1
      %s17 = ssub.s32 %s9, %s16
      %p18 = scmp.eq.s32.totalorder %s17, 0
      %s20 = sadd.s32 %s19, 1
      %s21 = scalar_select %p18, %s19, %s20
      %p24 = pneg %p18
      %p25 = scmp.eq.s32.totalorder %s9, 1
      %p26 = por %p24, %p25
      %p27 = scmp.ne.s32.totalorder %s19, %s22
      %p28 = scmp.eq.s32.totalorder %s9, 0
      %p29 = por %p27, %p28
      %p30 = scmp.ne.s32.totalorder %s19, %s22
      %p31 = scmp.eq.s32.totalorder %s14, 1
      %p32 = por %p30, %p31
      %p33 = scmp.ne.s32.totalorder %s22, %s23
      %p34 = scmp.eq.s32.totalorder %s14, 0
      %p35 = por %p33, %p34
      %p36 = scmp.ne.s32.totalorder %s22, %s23
      %p37 = scmp.eq.s32.totalorder %s15, 1
      %p38 = por %p36, %p37
      %p40 = scmp.ne.s32.totalorder %s23, %s39
      %p41 = scmp.eq.s32.totalorder %s15, 0
      %p42 = por %p40, %p41
      %s44 = sadd.s32 %s43, 1
      %p47 = scmp.eq.s32.totalorder %s9, 1
      %p48 = scmp.ne.s32.totalorder %s43, %s45
      %p49 = scmp.eq.s32.totalorder %s9, 0
      %p50 = por %p48, %p49
      %p51 = scmp.ne.s32.totalorder %s43, %s45
      %p52 = scmp.eq.s32.totalorder %s14, 1
      %p53 = por %p51, %p52
      %p54 = scmp.ne.s32.totalorder %s45, %s46
      %p55 = scmp.eq.s32.totalorder %s14, 0
      %p56 = por %p54, %p55
      %p57 = scmp.ne.s32.totalorder %s45, %s46
      %p58 = scmp.eq.s32.totalorder %s15, 1
      %p59 = por %p57, %p58
      %p61 = scmp.ne.s32.totalorder %s46, %s60
      %p62 = scmp.eq.s32.totalorder %s15, 0
      %p63 = por %p61, %p62
      %s65 = sadd.s32 %s64, 1
      %p68 = scmp.eq.s32.totalorder %s9, 1
      %p69 = scmp.ne.s32.totalorder %s64, %s66
      %p70 = scmp.eq.s32.totalorder %s9, 0
      %p71 = por %p69, %p70
      %p72 = scmp.ne.s32.totalorder %s64, %s66
      %p73 = scmp.eq.s32.totalorder %s14, 1
      %p74 = por %p72, %p73
      %p75 = scmp.ne.s32.totalorder %s66, %s67
      %p76 = scmp.eq.s32.totalorder %s14, 0
      %p77 = por %p75, %p76
      %p78 = scmp.ne.s32.totalorder %s66, %s67
      %p79 = scmp.eq.s32.totalorder %s15, 1
      %p80 = por %p78, %p79
      %p82 = scmp.ne.s32.totalorder %s67, %s81
      %p83 = scmp.eq.s32.totalorder %s15, 0
      %p84 = por %p82, %p83
      %s85 = ssub.s32 %s9, %s16
      %p86 = scmp.eq.s32.totalorder %s85, 0
      %s88 = sadd.s32 %s87, 1
      %s89 = scalar_select %p86, %s87, %s88
      %p92 = pneg %p86
      %p93 = scmp.eq.s32.totalorder %s9, 1
      %p94 = por %p92, %p93
      %p95 = scmp.ne.s32.totalorder %s87, %s90
      %p96 = scmp.eq.s32.totalorder %s9, 0
      %p97 = por %p95, %p96
      %p98 = scmp.ne.s32.totalorder %s87, %s90
      %p99 = scmp.eq.s32.totalorder %s14, 1
      %p100 = por %p98, %p99
      %p101 = scmp.ne.s32.totalorder %s90, %s91
      %p102 = scmp.eq.s32.totalorder %s14, 0
      %p103 = por %p101, %p102
      %p104 = scmp.ne.s32.totalorder %s90, %s91
      %p105 = scmp.eq.s32.totalorder %s15, 1
      %p106 = por %p104, %p105
      %p108 = scmp.ne.s32.totalorder %s91, %s107
      %p109 = scmp.eq.s32.totalorder %s15, 0
      %p110 = por %p108, %p109
      %p111 = scmp.le.s32.totalorder 1, %s9
      %p112 = scmp.lt.s32.totalorder %s9, 3
      %p113 = pnand %p111, %p112
      %p114 = pneg %p113
      // Predicated region
      $region9: #{_lambda_.10} parent=5 // pred_check
        _
      $region10: #{_lambda_.10} parent=5 // pred_check_branch
        %116 = sbr.rel (%p113) target = $region12
      $region11: #{_lambda_.10} parent=5 // pred_region
        %s117 = ssub.s32 %s9, 1
        // Predicated region
        $region13: #{_lambda_.10} parent=11 // pred_check
          %p118 = pneg %p56
        $region14: #{_lambda_.10} parent=11 // pred_check_branch
          %120 = sbr.rel (%p118) target = $region16
        $region15: #{_lambda_.10} parent=11 // pred_region
          _
        $region16: #{_lambda_.10} parent=11 // pred_fallthru
          _
        // Predicated region
        $region17: #{_lambda_.10} parent=11 // pred_check
          %p121 = pneg %p77
        $region18: #{_lambda_.10} parent=11 // pred_check_branch
          %123 = sbr.rel (%p121) target = $region20
        $region19: #{_lambda_.10} parent=11 // pred_region
          _
        $region20: #{_lambda_.10} parent=11 // pred_fallthru
          _
      $region12: #{_lambda_.10} parent=5 // pred_fallthru
        _
      %p124 = scmp.lt.s32.totalorder %s9, 2
      // Predicated region
      $region21: #{_lambda_.10} parent=5 // pred_check
        %p125 = pneg %p124
      $region22: #{_lambda_.10} parent=5 // pred_check_branch
        %127 = sbr.rel (%p125) target = $region24
      $region23: #{_lambda_.10} parent=5 // pred_region
        // Predicated region
        $region25: #{_lambda_.10} parent=23 // pred_check
          %p128 = pneg %p29
        $region26: #{_lambda_.10} parent=23 // pred_check_branch
          %130 = sbr.rel (%p128) target = $region28
        $region27: #{_lambda_.10} parent=23 // pred_region
          %s131 = smul.u32 2, %s9
          %s132 = ssub.s32 3, %s131
          %p133 = scmp.lt.s32.totalorder %s132, 2
          %s134 = scalar_select %p133, %s132, 2
          %s135 = smul.u32 128, %s134
          %p136 = scmp.lt.s32.totalorder %s131, 2
          %s137 = scalar_select %p136, %s131, 2
          %s138 = smul.addr %s137, 8
          %s139 = scalar_lea.vmem %s0, %s138
          %s140 = smul.u32 2, %s9
          %s141 = ssub.s32 3, %s140
          %p142 = scmp.lt.s32.totalorder %s141, 2
          %s143 = scalar_select %p142, %s141, 2
          %s144 = smul.u32 128, %s143
        $region28: #{_lambda_.10} parent=23 // pred_fallthru
          _
      $region24: #{_lambda_.10} parent=5 // pred_fallthru
        _
      %p145 = scmp.le.s32.totalorder 1, %s9
      %p146 = scmp.lt.s32.totalorder %s9, 3
      %p147 = pnand %p145, %p146
      %p148 = pneg %p147
      // Predicated region
      $region29: #{_lambda_.10} parent=5 // pred_check
        _
      $region30: #{_lambda_.10} parent=5 // pred_check_branch
        %150 = sbr.rel (%p147) target = $region32
      $region31: #{_lambda_.10} parent=5 // pred_region
        %s151 = ssub.s32 %s9, 1
        %s152 = smul.u32 2, %s14
        %s153 = ssub.s32 3, %s152
        %p154 = scmp.lt.s32.totalorder %s153, 2
        %s155 = scalar_select %p154, %s153, 2
        %s156 = smul.u32 128, %s155
        %p157 = scmp.lt.s32.totalorder %s152, 2
        %s158 = scalar_select %p157, %s152, 2
        %s159 = smul.addr %s158, 8
        %s160 = scalar_lea.vmem %s0, %s159
        %p161 = pneg %p35
        %p162 = pneg %p32
        %p163 = pneg %p56
        %p164 = pneg %p53
        %p165 = pneg %p77
        %p166 = pneg %p74
        %p167 = pneg %p103
        %p168 = pneg %p100
        %s169 = sand.u32 %s90, 1
        %s170 = sand.u32 %s90, 1
        %s171 = smul.addr %s170, 8
        %s172 = scalar_lea.vmem [#allocation2], %s171
        %s173 = smul.u32 2, %s14
        %s174 = ssub.s32 3, %s173
        %p175 = scmp.lt.s32.totalorder %s174, 2
        %s176 = scalar_select %p175, %s174, 2
        %s177 = smul.u32 128, %s176
        %p178 = scmp.lt.s32.totalorder %s173, 2
        %s179 = scalar_select %p178, %s173, 2
        %s180 = smul.addr %s179, 8
        %s181 = scalar_lea.vmem %s0, %s180
        %s182 = smul.u32 2, %s14
        %s183 = ssub.s32 3, %s182
        %p184 = scmp.lt.s32.totalorder %s183, 2
        %s185 = scalar_select %p184, %s183, 2
        %s186 = smul.u32 128, %s185
        %s187 = smul.u32 2, %s14
        %s188 = ssub.s32 3, %s187
        %p189 = scmp.lt.s32.totalorder %s188, 2
        %s190 = scalar_select %p189, %s188, 2
        %s191 = smul.u32 64, %s190
        %v192 = vld [vmem:[%s181] sm:$0xff]
        %v193 = vld [vmem:[%s181 + $0x8] sm:$0xff]
        %v194 = vld [vmem:[%s1] sm:$0x1]
        %v196 = vlaneseq
        %v197 = vshrl.u32 %v196, 7
        %v198 = vsub.s32 0, %v197
        %v199 = vrot.slane %v194, %v198
        %v201 = vmul.f32 %v192, %v199
        %v202 = vmul.f32 %v193, %v199
        %v203 = vld [vmem:[%s2] sm:$0x1]
        %v205 = vlaneseq
        %v206 = vshrl.u32 %v205, 7
        %v207 = vsub.s32 0, %v206
        %v208 = vrot.slane %v203, %v207
        %v210 = vadd.f32 %v201, %v208
        %v211 = vadd.f32 %v202, %v208
        %vm212 = vcmp.ge.f32.partialorder %v210, 0.0
        %vm213 = vcmp.ge.f32.partialorder %v211, 0.0
        %v214 = vmul.f32 %v210, 0.2
        %v215 = vmul.f32 %v211, 0.2
        %v216 = vsel %vm212, %v210, %v214
        %v217 = vsel %vm213, %v211, %v215
        %v218 = vpack.c.bf16 %v217, %v216
        %v220 = vunpack.c.l.b16 %v218
        %v221 = vunpack.c.h.b16 %v218
        %v222 = vpack.c.b16 %v220, %v220
        %v223 = vpack.c.b16 %v221, %v221
        %226 = vst [vmem:[%s172] sm:$0xf] %v222
        %227 = vst [vmem:[%s172 + $0x4] sm:$0xf] %v223
        %s228 = sand.u32 %s90, 1
        %s229 = sand.u32 %s90, 1
        %s230 = smul.addr %s229, 8
        %s231 = scalar_lea.vmem [#allocation2], %s230
        // Predicated region
        $region33: #{_lambda_.10} parent=31 // pred_check
          %p232 = pneg %p100
        $region34: #{_lambda_.10} parent=31 // pred_check_branch
          %234 = sbr.rel (%p232) target = $region36
        $region35: #{_lambda_.10} parent=31 // pred_region
          %s235 = smul.u32 2, %s14
          %s236 = ssub.s32 3, %s235
          %p237 = scmp.lt.s32.totalorder %s236, 2
          %s238 = scalar_select %p237, %s236, 2
          %s239 = smul.u32 64, %s238
          %p240 = scmp.ne.s32.totalorder 0, %s239
          %s241 = smul.addr %s235, 4
          %s242 = scalar_lea.vmem %s3, %s241
          // Predicated region
          $region37: #{_lambda_.10} parent=35 // pred_check
            %p243 = pneg %p240
          $region38: #{_lambda_.10} parent=35 // pred_check_branch
            %245 = sbr.rel (%p243) target = $region40
          $region39: #{_lambda_.10} parent=35 // pred_region
            // Predicated region
            $region41: #{_lambda_.10} parent=39 // pred_check
              _
            $region42: #{_lambda_.10} parent=39 // pred_check_branch
              %247 = sbr.rel target = $region44
            $region43: #{_lambda_.10} parent=39 // pred_region
              // Predicated region
              $region63: #{_lambda_.10} parent=43 // pred_check
                _
              $region64: #{_lambda_.10} parent=43 // pred_check_branch
                %298 = sbr.rel (0) target = $region66
              $region65: #{_lambda_.10} parent=43 // pred_region
                %s300 = sshrl.u32 %s238, 1
                // While loop
                $region67: #{_lambda_.10} parent=65 // loop_pre_header
                  _
                $region68: #{_lambda_.10} parent=65 // loop_header
                  %s302 = sphi 0, %s304
                  %p303 = scmp.ge.s32.totalorder %s302, %s300
                  %s307 = sphi 0, %s316
                  %s308 = sphi %s231, %s319
                  %s309 = sphi %s242, %s320
                $region69: #{_lambda_.10} parent=65 // loop_header_branch
                  %306 = sbr.rel (%p303) target = $region73
                $region70: #{_lambda_.10} parent=65 // loop_body
                  %v310 = vld [vmem:[%s308] sm:$0xf]
                  %311 = vst [vmem:[%s309] sm:$0xf] %v310
                  %v312 = vld [vmem:[%s308 + $0x4] sm:$0xf]
                  %313 = vst [vmem:[%s309 + $0x4] sm:$0xf] %v312
                  %s314 = sadd.s32 1, %s307
                  %p315 = scmp.ge.s32.totalorder %s314, %s300
                  %s316 = scalar_select %p315, 0, %s314
                  %s317 = smul.u32 %s316, 8
                  %s318 = smul.u32 %s316, 8
                  %s319 = scalar_lea.vmem %s231, %s317 [#allocation2]
                  %s320 = scalar_lea.vmem %s242, %s318
                $region71: #{_lambda_.10} parent=65 // loop_footer
                  %s304 = sadd.s32 %s302, 1
                $region72: #{_lambda_.10} parent=65 // loop_footer_branch
                  %301 = sbr.rel target = $region68
                $region73: #{_lambda_.10} parent=65 // loop_exit
                  _
                %s321 = sshrl.u32 %s238, 1
                %s322 = sand.u32 %s238, 1
                %s323 = smul.u32 %s321, 2
                %s324 = smul.u32 4, %s323
                %s325 = scalar_lea.vmem %s231, %s324 [#allocation2]
                %s326 = smul.u32 4, %s323
                %s327 = scalar_lea.vmem %s242, %s326
                // While loop
                $region74: #{_lambda_.10} parent=65 // loop_pre_header
                  _
                $region75: #{_lambda_.10} parent=65 // loop_header
                  %s329 = sphi 0, %s331
                  %p330 = scmp.ge.s32.totalorder %s329, %s322
                  %s334 = sphi 0, %s341
                  %s335 = sphi %s325, %s344
                  %s336 = sphi %s327, %s345
                $region76: #{_lambda_.10} parent=65 // loop_header_branch
                  %333 = sbr.rel (%p330) target = $region80
                $region77: #{_lambda_.10} parent=65 // loop_body
                  %v337 = vld [vmem:[%s335] sm:$0xf]
                  %338 = vst [vmem:[%s336] sm:$0xf] %v337
                  %s339 = sadd.s32 1, %s334
                  %p340 = scmp.ge.s32.totalorder %s339, %s322
                  %s341 = scalar_select %p340, 0, %s339
                  %s342 = smul.u32 %s341, 4
                  %s343 = smul.u32 %s341, 4
                  %s344 = scalar_lea.vmem %s325, %s342 [#allocation2]
                  %s345 = scalar_lea.vmem %s327, %s343
                $region78: #{_lambda_.10} parent=65 // loop_footer
                  %s331 = sadd.s32 %s329, 1
                $region79: #{_lambda_.10} parent=65 // loop_footer_branch
                  %328 = sbr.rel target = $region75
                $region80: #{_lambda_.10} parent=65 // loop_exit
                  _
              $region66: #{_lambda_.10} parent=43 // pred_fallthru
                _
            $region44: #{_lambda_.10} parent=39 // pred_fallthru
              _
            // Predicated region
            $region45: #{_lambda_.10} parent=39 // pred_check
              _
            $region46: #{_lambda_.10} parent=39 // pred_check_branch
              %249 = sbr.rel (0) target = $region48
            $region47: #{_lambda_.10} parent=39 // pred_region
              %s251 = sshrl.u32 %s238, 1
              // While loop
              $region49: #{_lambda_.10} parent=47 // loop_pre_header
                _
              $region50: #{_lambda_.10} parent=47 // loop_header
                %s253 = sphi 0, %s255
                %p254 = scmp.ge.s32.totalorder %s253, %s251
                %s258 = sphi 0, %s267
                %s259 = sphi %s231, %s270
                %s260 = sphi %s242, %s271
              $region51: #{_lambda_.10} parent=47 // loop_header_branch
                %257 = sbr.rel (%p254) target = $region55
              $region52: #{_lambda_.10} parent=47 // loop_body
                %v261 = vld [vmem:[%s259] sm:$0xf]
                %262 = vst [vmem:[%s260] sm:$0xf] %v261
                %v263 = vld [vmem:[%s259 + $0x4] sm:$0xf]
                %264 = vst [vmem:[%s260 + $0x4] sm:$0xf] %v263
                %s265 = sadd.s32 1, %s258
                %p266 = scmp.ge.s32.totalorder %s265, %s251
                %s267 = scalar_select %p266, 0, %s265
                %s268 = smul.u32 %s267, 8
                %s269 = smul.u32 %s267, 8
                %s270 = scalar_lea.vmem %s231, %s268 [#allocation2]
                %s271 = scalar_lea.vmem %s242, %s269
              $region53: #{_lambda_.10} parent=47 // loop_footer
                %s255 = sadd.s32 %s253, 1
              $region54: #{_lambda_.10} parent=47 // loop_footer_branch
                %252 = sbr.rel target = $region50
              $region55: #{_lambda_.10} parent=47 // loop_exit
                _
              %s272 = sshrl.u32 %s238, 1
              %s273 = sand.u32 %s238, 1
              %s274 = smul.u32 %s272, 2
              %s275 = smul.u32 4, %s274
              %s276 = scalar_lea.vmem %s231, %s275 [#allocation2]
              %s277 = smul.u32 4, %s274
              %s278 = scalar_lea.vmem %s242, %s277
              // While loop
              $region56: #{_lambda_.10} parent=47 // loop_pre_header
                _
              $region57: #{_lambda_.10} parent=47 // loop_header
                %s280 = sphi 0, %s282
                %p281 = scmp.ge.s32.totalorder %s280, %s273
                %s285 = sphi 0, %s292
                %s286 = sphi %s276, %s295
                %s287 = sphi %s278, %s296
              $region58: #{_lambda_.10} parent=47 // loop_header_branch
                %284 = sbr.rel (%p281) target = $region62
              $region59: #{_lambda_.10} parent=47 // loop_body
                %v288 = vld [vmem:[%s286] sm:$0xf]
                %289 = vst [vmem:[%s287] sm:$0xf] %v288
                %s290 = sadd.s32 1, %s285
                %p291 = scmp.ge.s32.totalorder %s290, %s273
                %s292 = scalar_select %p291, 0, %s290
                %s293 = smul.u32 %s292, 4
                %s294 = smul.u32 %s292, 4
                %s295 = scalar_lea.vmem %s276, %s293 [#allocation2]
                %s296 = scalar_lea.vmem %s278, %s294
              $region60: #{_lambda_.10} parent=47 // loop_footer
                %s282 = sadd.s32 %s280, 1
              $region61: #{_lambda_.10} parent=47 // loop_footer_branch
                %279 = sbr.rel target = $region57
              $region62: #{_lambda_.10} parent=47 // loop_exit
                _
            $region48: #{_lambda_.10} parent=39 // pred_fallthru
              _
          $region40: #{_lambda_.10} parent=35 // pred_fallthru
            _
          %346 = vnop
        $region36: #{_lambda_.10} parent=31 // pred_fallthru
          _
      $region32: #{_lambda_.10} parent=5 // pred_fallthru
        _
      %p347 = scmp.le.s32.totalorder 2, %s9
      // Predicated region
      $region81: #{_lambda_.10} parent=5 // pred_check
        %p348 = pneg %p347
      $region82: #{_lambda_.10} parent=5 // pred_check_branch
        %350 = sbr.rel (%p348) target = $region84
      $region83: #{_lambda_.10} parent=5 // pred_region
        %s351 = ssub.s32 %s9, 2
        // Predicated region
        $region85: #{_lambda_.10} parent=83 // pred_check
          %p352 = pneg %p106
        $region86: #{_lambda_.10} parent=83 // pred_check_branch
          %354 = sbr.rel (%p352) target = $region88
        $region87: #{_lambda_.10} parent=83 // pred_region
          %s355 = sand.u32 %s91, 1
          %s356 = sand.u32 %s91, 1
          %s357 = smul.addr %s356, 8
          %s358 = scalar_lea.vmem [#allocation2], %s357
        $region88: #{_lambda_.10} parent=83 // pred_fallthru
          _
      $region84: #{_lambda_.10} parent=5 // pred_fallthru
        _
    $region6: #{_lambda_.10} parent=1 // loop_footer
      %s13 = sadd.s32 1, %s9
    $region7: #{_lambda_.10} parent=1 // loop_footer_branch
      %8 = sbr.rel target = $region3
    $region8: #{_lambda_.10} parent=1 // loop_exit
      _

// kernel: _lambda_.11
$region0: #{_lambda_.11}
  #allocation0 [shape = 'u32[]', space=smem, size = 0x4, offset = 0x4, fixed_abs, tag = 'smem constant byte address 0x4 - core index']
  #allocation1 [shape = 'u32[144,128]{1,0:T(1,128)}', space=vmem, size = 0x12000, scoped, tag = 'internal scratch']
  %s0 = inlined_call_operand.vmem [shape: bf16[8,512], index: 0, kind: input, shape index: {}]
  %s1 = inlined_call_operand.vmem [shape: bf16[512,128], index: 1, kind: input, shape index: {}]
  %s2 = inlined_call_operand.vmem [shape: f32[1,128], index: 2, kind: input, shape index: {}]
  %s3 = inlined_call_operand.vmem [shape: f32[8,128], index: 3, kind: output, shape index: {}]
  %s4 = sld [smem:[#allocation0]]
  $region22: #{_lambda_.11} parent=0
    _
  %s6 = ssub.s32 1, %s4
  %s7 = scalar_select 0, %s6, %s4
  // Predicated region
  $region2: #{_lambda_.11} parent=0 // pred_check
    _
  $region3: #{_lambda_.11} parent=0 // pred_check_branch
    %9 = sbr.rel (0) target = $region5
  $region4: #{_lambda_.11} parent=0 // pred_region
    _
  $region5: #{_lambda_.11} parent=0 // pred_fallthru
    _
  // Predicated region
  $region6: #{_lambda_.11} parent=0 // pred_check
    _
  $region7: #{_lambda_.11} parent=0 // pred_check_branch
    %11 = sbr.rel (0) target = $region9
  $region8: #{_lambda_.11} parent=0 // pred_region
    _
  $region9: #{_lambda_.11} parent=0 // pred_fallthru
    _
  // Predicated region
  $region10: #{_lambda_.11} parent=0 // pred_check
    _
  $region11: #{_lambda_.11} parent=0 // pred_check_branch
    %13 = sbr.rel (0) target = $region13
  $region12: #{_lambda_.11} parent=0 // pred_region
    _
  $region13: #{_lambda_.11} parent=0 // pred_fallthru
    _
  %v15 = vld [vmem:[%s0] sm:$0xff]
  %v16 = vld [vmem:[%s0 + $0x8] sm:$0xff]
  %v17 = vld [vmem:[%s1] sm:$0xf]
  %v18 = vld [vmem:[%s1 + $0x4] sm:$0xf]
  %v19 = vld [vmem:[%s1 + $0x8] sm:$0xf]
  %v20 = vld [vmem:[%s1 + $0xc] sm:$0xf]
  %v21 = vld [vmem:[%s1 + $0x10] sm:$0xf]
  %v22 = vld [vmem:[%s1 + $0x14] sm:$0xf]
  %v23 = vld [vmem:[%s1 + $0x18] sm:$0xf]
  %v24 = vld [vmem:[%s1 + $0x1c] sm:$0xf]
  %v25 = vld [vmem:[%s1 + $0x20] sm:$0xf]
  %v26 = vld [vmem:[%s1 + $0x24] sm:$0xf]
  %v27 = vld [vmem:[%s1 + $0x28] sm:$0xf]
  %v28 = vld [vmem:[%s1 + $0x2c] sm:$0xf]
  %v29 = vld [vmem:[%s1 + $0x30] sm:$0xf]
  %v30 = vld [vmem:[%s1 + $0x34] sm:$0xf]
  %v31 = vld [vmem:[%s1 + $0x38] sm:$0xf]
  %v32 = vld [vmem:[%s1 + $0x3c] sm:$0xf]
  %v33 = vld [vmem:[%s1 + $0x40] sm:$0xf]
  %v34 = vld [vmem:[%s1 + $0x44] sm:$0xf]
  %v35 = vld [vmem:[%s1 + $0x48] sm:$0xf]
  %v36 = vld [vmem:[%s1 + $0x4c] sm:$0xf]
  %v37 = vld [vmem:[%s1 + $0x50] sm:$0xf]
  %v38 = vld [vmem:[%s1 + $0x54] sm:$0xf]
  %v39 = vld [vmem:[%s1 + $0x58] sm:$0xf]
  %v40 = vld [vmem:[%s1 + $0x5c] sm:$0xf]
  %v41 = vld [vmem:[%s1 + $0x60] sm:$0xf]
  %v42 = vld [vmem:[%s1 + $0x64] sm:$0xf]
  %v43 = vld [vmem:[%s1 + $0x68] sm:$0xf]
  %v44 = vld [vmem:[%s1 + $0x6c] sm:$0xf]
  %v45 = vld [vmem:[%s1 + $0x70] sm:$0xf]
  %v46 = vld [vmem:[%s1 + $0x74] sm:$0xf]
  %v47 = vld [vmem:[%s1 + $0x78] sm:$0xf]
  %v48 = vld [vmem:[%s1 + $0x7c] sm:$0xf]
  %v49 = vld [vmem:[%s1 + $0x80] sm:$0xf]
  %v50 = vld [vmem:[%s1 + $0x84] sm:$0xf]
  %v51 = vld [vmem:[%s1 + $0x88] sm:$0xf]
  %v52 = vld [vmem:[%s1 + $0x8c] sm:$0xf]
  %v53 = vld [vmem:[%s1 + $0x90] sm:$0xf]
  %v54 = vld [vmem:[%s1 + $0x94] sm:$0xf]
  %v55 = vld [vmem:[%s1 + $0x98] sm:$0xf]
  %v56 = vld [vmem:[%s1 + $0x9c] sm:$0xf]
  %v57 = vld [vmem:[%s1 + $0xa0] sm:$0xf]
  %v58 = vld [vmem:[%s1 + $0xa4] sm:$0xf]
  %v59 = vld [vmem:[%s1 + $0xa8] sm:$0xf]
  %v60 = vld [vmem:[%s1 + $0xac] sm:$0xf]
  %v61 = vld [vmem:[%s1 + $0xb0] sm:$0xf]
  %v62 = vld [vmem:[%s1 + $0xb4] sm:$0xf]
  %v63 = vld [vmem:[%s1 + $0xb8] sm:$0xf]
  %v64 = vld [vmem:[%s1 + $0xbc] sm:$0xf]
  %v65 = vld [vmem:[%s1 + $0xc0] sm:$0xf]
  %v66 = vld [vmem:[%s1 + $0xc4] sm:$0xf]
  %v67 = vld [vmem:[%s1 + $0xc8] sm:$0xf]
  %v68 = vld [vmem:[%s1 + $0xcc] sm:$0xf]
  %v69 = vld [vmem:[%s1 + $0xd0] sm:$0xf]
  %v70 = vld [vmem:[%s1 + $0xd4] sm:$0xf]
  %v71 = vld [vmem:[%s1 + $0xd8] sm:$0xf]
  %v72 = vld [vmem:[%s1 + $0xdc] sm:$0xf]
  %v73 = vld [vmem:[%s1 + $0xe0] sm:$0xf]
  %v74 = vld [vmem:[%s1 + $0xe4] sm:$0xf]
  %v75 = vld [vmem:[%s1 + $0xe8] sm:$0xf]
  %v76 = vld [vmem:[%s1 + $0xec] sm:$0xf]
  %v77 = vld [vmem:[%s1 + $0xf0] sm:$0xf]
  %v78 = vld [vmem:[%s1 + $0xf4] sm:$0xf]
  %v79 = vld [vmem:[%s1 + $0xf8] sm:$0xf]
  %v80 = vld [vmem:[%s1 + $0xfc] sm:$0xf]
  %v81 = vld [vmem:[%s2] sm:$0x1]
  %v83 = vlaneseq
  %v84 = vshrl.u32 %v83, 7
  %v85 = vsub.s32 0, %v84
  %v86 = vrot.slane %v81, %v85
  %v90 = vunpack.c.l.b16 %v15
  %v91 = vunpack.c.h.b16 %v15
  %v92 = vunpack.c.l.b16 %v16
  %v93 = vunpack.c.h.b16 %v16
  %v94 = vpack.c.b16 %v90, %v90
  %v95 = vpack.c.b16 %v91, %v91
  %v96 = vpack.c.b16 %v92, %v92
  %v97 = vpack.c.b16 %v93, %v93
  %v166 = vunpack.c.l.b16 %v17
  %v167 = vunpack.c.l.b16 %v18
  %v168 = vunpack.c.l.b16 %v19
  %v169 = vunpack.c.l.b16 %v20
  %v170 = vunpack.c.l.b16 %v21
  %v171 = vunpack.c.l.b16 %v22
  %v172 = vunpack.c.l.b16 %v23
  %v173 = vunpack.c.l.b16 %v24
  %v174 = vunpack.c.l.b16 %v25
  %v175 = vunpack.c.l.b16 %v26
  %v176 = vunpack.c.l.b16 %v27
  %v177 = vunpack.c.l.b16 %v28
  %v178 = vunpack.c.l.b16 %v29
  %v179 = vunpack.c.l.b16 %v30
  %v180 = vunpack.c.l.b16 %v31
  %v181 = vunpack.c.l.b16 %v32
  %v182 = vunpack.c.l.b16 %v33
  %v183 = vunpack.c.l.b16 %v34
  %v184 = vunpack.c.l.b16 %v35
  %v185 = vunpack.c.l.b16 %v36
  %v186 = vunpack.c.l.b16 %v37
  %v187 = vunpack.c.l.b16 %v38
  %v188 = vunpack.c.l.b16 %v39
  %v189 = vunpack.c.l.b16 %v40
  %v190 = vunpack.c.l.b16 %v41
  %v191 = vunpack.c.l.b16 %v42
  %v192 = vunpack.c.l.b16 %v43
  %v193 = vunpack.c.l.b16 %v44
  %v194 = vunpack.c.l.b16 %v45
  %v195 = vunpack.c.l.b16 %v46
  %v196 = vunpack.c.l.b16 %v47
  %v197 = vunpack.c.l.b16 %v48
  %v198 = vunpack.c.l.b16 %v49
  %v199 = vunpack.c.l.b16 %v50
  %v200 = vunpack.c.l.b16 %v51
  %v201 = vunpack.c.l.b16 %v52
  %v202 = vunpack.c.l.b16 %v53
  %v203 = vunpack.c.l.b16 %v54
  %v204 = vunpack.c.l.b16 %v55
  %v205 = vunpack.c.l.b16 %v56
  %v206 = vunpack.c.l.b16 %v57
  %v207 = vunpack.c.l.b16 %v58
  %v208 = vunpack.c.l.b16 %v59
  %v209 = vunpack.c.l.b16 %v60
  %v210 = vunpack.c.l.b16 %v61
  %v211 = vunpack.c.l.b16 %v62
  %v212 = vunpack.c.l.b16 %v63
  %v213 = vunpack.c.l.b16 %v64
  %v214 = vunpack.c.l.b16 %v65
  %v215 = vunpack.c.l.b16 %v66
  %v216 = vunpack.c.l.b16 %v67
  %v217 = vunpack.c.l.b16 %v68
  %v218 = vunpack.c.l.b16 %v69
  %v219 = vunpack.c.l.b16 %v70
  %v220 = vunpack.c.l.b16 %v71
  %v221 = vunpack.c.l.b16 %v72
  %v222 = vunpack.c.l.b16 %v73
  %v223 = vunpack.c.l.b16 %v74
  %v224 = vunpack.c.l.b16 %v75
  %v225 = vunpack.c.l.b16 %v76
  %v226 = vunpack.c.l.b16 %v77
  %v227 = vunpack.c.l.b16 %v78
  %v228 = vunpack.c.l.b16 %v79
  %v229 = vunpack.c.l.b16 %v80
  %v230 = vpack.c.b16 %v167, %v166
  %v231 = vpack.c.b16 %v169, %v168
  %v232 = vpack.c.b16 %v171, %v170
  %v233 = vpack.c.b16 %v173, %v172
  %v234 = vpack.c.b16 %v175, %v174
  %v235 = vpack.c.b16 %v177, %v176
  %v236 = vpack.c.b16 %v179, %v178
  %v237 = vpack.c.b16 %v181, %v180
  %v238 = vpack.c.b16 %v183, %v182
  %v239 = vpack.c.b16 %v185, %v184
  %v240 = vpack.c.b16 %v187, %v186
  %v241 = vpack.c.b16 %v189, %v188
  %v242 = vpack.c.b16 %v191, %v190
  %v243 = vpack.c.b16 %v193, %v192
  %v244 = vpack.c.b16 %v195, %v194
  %v245 = vpack.c.b16 %v197, %v196
  %v246 = vpack.c.b16 %v199, %v198
  %v247 = vpack.c.b16 %v201, %v200
  %v248 = vpack.c.b16 %v203, %v202
  %v249 = vpack.c.b16 %v205, %v204
  %v250 = vpack.c.b16 %v207, %v206
  %v251 = vpack.c.b16 %v209, %v208
  %v252 = vpack.c.b16 %v211, %v210
  %v253 = vpack.c.b16 %v213, %v212
  %v254 = vpack.c.b16 %v215, %v214
  %v255 = vpack.c.b16 %v217, %v216
  %v256 = vpack.c.b16 %v219, %v218
  %v257 = vpack.c.b16 %v221, %v220
  %v258 = vpack.c.b16 %v223, %v222
  %v259 = vpack.c.b16 %v225, %v224
  %v260 = vpack.c.b16 %v227, %v226
  %v261 = vpack.c.b16 %v229, %v228
  %294 = vmatprep.subr.bf16.mxu0 0
  %295 = vmatpush1.bf16.msra.mxu0 %v230
  %296 = vmatprep.subr.bf16.mxu0 0
  %297 = vmatpush1.bf16.msra.mxu0 %v231
  %298 = vmatprep.subr.bf16.mxu0 0
  %299 = vmatpush1.bf16.msra.mxu0 %v232
  %300 = vmatprep.subr.bf16.mxu0 0
  %301 = vmatpush1.bf16.msra.mxu0 %v233
  %302 = vmatprep.subr.bf16.mxu0 0
  %303 = vmatpush1.bf16.msra.mxu0 %v234
  %304 = vmatprep.subr.bf16.mxu0 0
  %305 = vmatpush1.bf16.msra.mxu0 %v235
  %306 = vmatprep.subr.bf16.mxu0 0
  %307 = vmatpush1.bf16.msra.mxu0 %v236
  %308 = vmatprep.subr.bf16.mxu0 0
  %309 = vmatpush1.bf16.msra.mxu0 %v237
  %310 = vmatprep.subr.bf16.mxu0 0
  %311 = vmatpush1.bf16.msra.mxu0 %v238
  %312 = vmatprep.subr.bf16.mxu0 0
  %313 = vmatpush1.bf16.msra.mxu0 %v239
  %314 = vmatprep.subr.bf16.mxu0 0
  %315 = vmatpush1.bf16.msra.mxu0 %v240
  %316 = vmatprep.subr.bf16.mxu0 0
  %317 = vmatpush1.bf16.msra.mxu0 %v241
  %318 = vmatprep.subr.bf16.mxu0 0
  %319 = vmatpush1.bf16.msra.mxu0 %v242
  %320 = vmatprep.subr.bf16.mxu0 0
  %321 = vmatpush1.bf16.msra.mxu0 %v243
  %322 = vmatprep.subr.bf16.mxu0 0
  %323 = vmatpush1.bf16.msra.mxu0 %v244
  %324 = vmatprep.subr.bf16.mxu0 0
  %325 = vmatpush1.bf16.msra.mxu0 %v245
  %326 = vmatprep.mubr.bf16.mxu0 %v95
  %327 = vmatmul.mubr.bf16.gmra.mrb[0].mxu0 %v94
  %v328 = vpop.f32.mrb[0].mxu0
  %v329 = vadd.f32 %v86, %v328
  %v330 = vpop.f32.mrb[0].mxu0
  %v331 = vpop.f32.mrb[0].mxu0
  %v332 = vpop.f32.mrb[0].mxu0
  %333 = vdwg.mxu0
  %334 = vmatprep.subr.bf16.mxu0 0
  %335 = vmatpush1.bf16.msra.mxu0 %v246
  %336 = vmatprep.subr.bf16.mxu0 0
  %337 = vmatpush1.bf16.msra.mxu0 %v247
  %338 = vmatprep.subr.bf16.mxu0 0
  %339 = vmatpush1.bf16.msra.mxu0 %v248
  %340 = vmatprep.subr.bf16.mxu0 0
  %341 = vmatpush1.bf16.msra.mxu0 %v249
  %342 = vmatprep.subr.bf16.mxu0 0
  %343 = vmatpush1.bf16.msra.mxu0 %v250
  %344 = vmatprep.subr.bf16.mxu0 0
  %345 = vmatpush1.bf16.msra.mxu0 %v251
  %346 = vmatprep.subr.bf16.mxu0 0
  %347 = vmatpush1.bf16.msra.mxu0 %v252
  %348 = vmatprep.subr.bf16.mxu0 0
  %349 = vmatpush1.bf16.msra.mxu0 %v253
  %350 = vmatprep.subr.bf16.mxu0 0
  %351 = vmatpush1.bf16.msra.mxu0 %v254
  %352 = vmatprep.subr.bf16.mxu0 0
  %353 = vmatpush1.bf16.msra.mxu0 %v255
  %354 = vmatprep.subr.bf16.mxu0 0
  %355 = vmatpush1.bf16.msra.mxu0 %v256
  %356 = vmatprep.subr.bf16.mxu0 0
  %357 = vmatpush1.bf16.msra.mxu0 %v257
  %358 = vmatprep.subr.bf16.mxu0 0
  %359 = vmatpush1.bf16.msra.mxu0 %v258
  %360 = vmatprep.subr.bf16.mxu0 0
  %361 = vmatpush1.bf16.msra.mxu0 %v259
  %362 = vmatprep.subr.bf16.mxu0 0
  %363 = vmatpush1.bf16.msra.mxu0 %v260
  %364 = vmatprep.subr.bf16.mxu0 0
  %365 = vmatpush1.bf16.msra.mxu0 %v261
  %366 = vmatprep.mubr.bf16.mxu0 %v97
  %367 = vmatmul.mubr.bf16.gmra.mrb[0].mxu0 %v96
  %v368 = vpop.f32.mrb[0].mxu0
  %v369 = vadd.f32 %v329, %v368
  %v370 = vpop.f32.mrb[0].mxu0
  %v371 = vpop.f32.mrb[0].mxu0
  %v372 = vpop.f32.mrb[0].mxu0
  %373 = vdwg.mxu0
  %374 = vst [vmem:[%s3] sm:$0xff] %v369
  // Predicated region
  $region14: #{_lambda_.11} parent=0 // pred_check
    _
  $region15: #{_lambda_.11} parent=0 // pred_check_branch
    %376 = sbr.rel (0) target = $region17
  $region16: #{_lambda_.11} parent=0 // pred_region
    _
  $region17: #{_lambda_.11} parent=0 // pred_fallthru
    _
  // Predicated region
  $region18: #{_lambda_.11} parent=0 // pred_check
    _
  $region19: #{_lambda_.11} parent=0 // pred_check_branch
    %378 = sbr.rel (0) target = $region21
  $region20: #{_lambda_.11} parent=0 // pred_region
    _
  $region21: #{_lambda_.11} parent=0 // pred_fallthru
    _

</llo_original>
